<compile_context>
chip_gen: v6e
topology: v6e:2x2x1
jax: 0.10.0
libtpu: 0.0.40
codegen_flags: <defaults>
</compile_context>

<pallas_src>
import functools

import jax
import jax.numpy as jnp
import numpy as np
from jax.experimental import pallas as pl
from jax.experimental.pallas import tpu as pltpu

BN_EPS = 1e-5


# ----------------------------- Pallas kernel -------------------------------- #
def _shift_lanes(y, d):
    """Circular lane shift: result[..., m] = y[..., (m + d) % M].

    Implemented as a concat of two static lane slices (unambiguous semantics).
    Wrapped-around lanes are always zeroed by the boundary masks downstream,
    so only the shift direction matters.
    """
    m = y.shape[-1]
    d = d % m
    if d == 0:
        return y
    return jnp.concatenate([y[:, d:], y[:, :d]], axis=-1)


def _bn_scale_shift(y, gamma, beta, n_total, n_zero=0):
    """Training-mode BatchNorm folded into (scale, shift).

    `y` holds conv outputs on interior positions only; `n_zero` additional
    positions whose conv output is exactly zero (spatial zero-padding through a
    bias-free 1x1 conv) are folded into the statistics analytically: they add
    nothing to the sum and n_zero*mean^2 to the centered sum of squares.
    """
    mean = jnp.sum(y, axis=-1, keepdims=True) / n_total
    var = (jnp.sum((y - mean) ** 2, axis=-1, keepdims=True)
           + n_zero * mean * mean) / n_total
    scale = gamma * jax.lax.rsqrt(var + BN_EPS)
    shift = beta - mean * scale
    return scale, shift


def _bottleneck_kernel(img_w, m_pad,
                       x_ref, w1_ref, w2_ref, w3_ref, wd_ref,
                       g1_ref, b1_ref, g2_ref, b2_ref,
                       g3_ref, b3_ref, gd_ref, bd_ref, mask_ref,
                       out_ref, border_ref):
    x = x_ref[...]                         # (Cin, Mi), Mi = N*H*W on lanes
    m_int = x.shape[-1]
    masks = mask_ref[...]                  # (4, Mi): h!=0, h!=H-1, w!=0, w!=W-1

    # ---- down_sample branch: 1x1 conv (pad=1) + BN, interior rows only ----
    yd = jnp.dot(wd_ref[...], x, preferred_element_type=jnp.float32)
    sc_d, sh_d = _bn_scale_shift(yd, gd_ref[...], bd_ref[...],
                                 m_pad, m_pad - m_int)
    identity = yd * sc_d + sh_d            # (4*Cout, Mi), stays in VMEM

    # ---- conv1 (1x1) + bn1 + relu ----
    y1 = jnp.dot(w1_ref[...], x, preferred_element_type=jnp.float32)
    sc1, sh1 = _bn_scale_shift(y1, g1_ref[...], b1_ref[...], m_int)
    y1 = jnp.maximum(y1 * sc1 + sh1, 0.0)  # (Cout, Mi)

    # ---- conv2 (3x3, pad=1) + bn2 + relu: 9 accumulated matmuls over
    #      lane-shifted, boundary-masked views of y1 (no HBM im2col) ----
    y2 = None
    tap = 0
    for di in (-1, 0, 1):
        for dj in (-1, 0, 1):
            t = _shift_lanes(y1, di * img_w + dj)
            if di == -1:
                t = t * masks[0:1, :]
            elif di == 1:
                t = t * masks[1:2, :]
            if dj == -1:
                t = t * masks[2:3, :]
            elif dj == 1:
                t = t * masks[3:4, :]
            contrib = jnp.dot(w2_ref[tap], t, preferred_element_type=jnp.float32)
            y2 = contrib if y2 is None else y2 + contrib
            tap += 1
    sc2, sh2 = _bn_scale_shift(y2, g2_ref[...], b2_ref[...], m_int)
    y2 = jnp.maximum(y2 * sc2 + sh2, 0.0)  # (Cout, Mi)

    # ---- conv3 (1x1, pad=1) + bn3 + residual add + relu, interior only ----
    y3 = jnp.dot(w3_ref[...], y2, preferred_element_type=jnp.float32)
    sc3, sh3 = _bn_scale_shift(y3, g3_ref[...], b3_ref[...],
                               m_pad, m_pad - m_int)
    out_ref[...] = jnp.maximum(y3 * sc3 + sh3 + identity, 0.0)

    # Padded border of the output is constant per channel: conv3 and the
    # down-sample conv are exactly 0 there -> relu(shift3 + shift_d).
    border_ref[...] = jnp.maximum(sh3 + sh_d, 0.0)


# --------------------------------- Wrapper ---------------------------------- #
def bottleneck_forward(x_nchw, params):
    n, cin, h, w = x_nchw.shape
    cout = params["w1_t"].shape[0]
    cexp = 4 * cout
    hp, wp = h + 2, w + 2
    m_int = n * h * w
    m_pad = n * hp * wp

    # Layout glue (channels-major, spatial flattened onto the lane axis).
    xt = jnp.transpose(x_nchw, (1, 0, 2, 3)).reshape(cin, m_int)
    w1 = params["w1_t"].reshape(cout, cin)
    w3 = params["w3_t"].reshape(cexp, cin)
    wd = params["wd_t"].reshape(cexp, cin)
    # (Cout, Cin, 3, 3) -> (9, Cout, Cin), tap index = kh*3 + kw.
    w2 = jnp.transpose(params["w2_t"], (2, 3, 0, 1)).reshape(9, cout, cin)

    # Static boundary masks for the 3x3 taps (computed once, host-side).
    idx = np.arange(m_int)
    wpos, hpos = idx % w, (idx // w) % h
    masks = jnp.asarray(np.stack([hpos != 0, hpos != h - 1,
                                  wpos != 0, wpos != w - 1]).astype(np.float32))

    col = lambda v: v.reshape(-1, 1)
    args = [xt, w1, w2, w3, wd,
            col(params["g1"]), col(params["b1"]),
            col(params["g2"]), col(params["b2"]),
            col(params["g3"]), col(params["b3"]),
            col(params["gd"]), col(params["bd"]),
            masks]

    out_int, border = pl.pallas_call(
        functools.partial(_bottleneck_kernel, w, m_pad),
        out_shape=(jax.ShapeDtypeStruct((cexp, m_int), jnp.float32),
                   jax.ShapeDtypeStruct((cexp, 1), jnp.float32)),
        in_specs=[pl.BlockSpec(memory_space=pltpu.MemorySpace.VMEM)] * len(args),
        out_specs=(pl.BlockSpec(memory_space=pltpu.MemorySpace.VMEM),
                   pl.BlockSpec(memory_space=pltpu.MemorySpace.VMEM)),
        compiler_params=pltpu.CompilerParams(
            vmem_limit_bytes=32 * 1024 * 1024),   # safe on v7x's 64 MiB VMEM
    )(*args)

    # Reassemble NCHW output: interior from the kernel, border from the
    # analytic per-channel constant.
    interior = jnp.transpose(out_int.reshape(cexp, n, h, w), (1, 0, 2, 3))
    full = jnp.broadcast_to(border.reshape(1, cexp, 1, 1), (n, cexp, hp, wp))
    return full.at[:, :, 1:h + 1, 1:w + 1].set(interior)


# ------------------------ Pure-JAX reference (check) ------------------------ #
def _mm(a, b):
    return jnp.matmul(a, b, precision=jax.lax.Precision.HIGHEST)


def _bn_train_ref(y, gamma, beta):  # y: (M, C)
    mean = y.mean(axis=0, keepdims=True)
    var = ((y - mean) ** 2).mean(axis=0, keepdims=True)
    return ((y - mean) * jax.lax.rsqrt(var + BN_EPS)
            * gamma.reshape(1, -1) + beta.reshape(1, -1))


def _im2col_3x3_pad1(x_nhwc):
    n, h, w, c = x_nhwc.shape
    xp = jnp.pad(x_nhwc, ((0, 0), (1, 1), (1, 1), (0, 0)))
    cols = [xp[:, i:i + h, j:j + w, :] for i in range(3) for j in range(3)]
    return jnp.concatenate(cols, axis=-1).reshape(n * h * w, 9 * c)


def bottleneck_ref(x_nchw, p):
    n, cin, h, w = x_nchw.shape
    cout = p["w1_t"].shape[0]
    cexp = 4 * cout
    hp, wp = h + 2, w + 2
    x = jnp.transpose(x_nchw, (0, 2, 3, 1))
    xpad = jnp.pad(x, ((0, 0), (1, 1), (1, 1), (0, 0)))

    w1 = p["w1_t"].reshape(cout, cin).T
    w3 = p["w3_t"].reshape(cexp, cin).T
    wd = p["wd_t"].reshape(cexp, cin).T
    w2 = jnp.transpose(p["w2_t"], (2, 3, 1, 0)).reshape(9 * cin, cout)

    identity = _bn_train_ref(_mm(xpad.reshape(n * hp * wp, cin), wd),
                             p["gd"], p["bd"])
    y = jnp.maximum(_bn_train_ref(_mm(x.reshape(n * h * w, cin), w1),
                                  p["g1"], p["b1"]), 0.0).reshape(n, h, w, cout)
    y = jnp.maximum(_bn_train_ref(_mm(_im2col_3x3_pad1(y), w2),
                                  p["g2"], p["b2"]), 0.0).reshape(n, h, w, cout)
    ypad = jnp.pad(y, ((0, 0), (1, 1), (1, 1), (0, 0)))
    out = jnp.maximum(_bn_train_ref(_mm(ypad.reshape(n * hp * wp, cout), w3),
                                    p["g3"], p["b3"]) + identity, 0.0)
    return jnp.transpose(out.reshape(n, hp, wp, cexp), (0, 3, 1, 2))


# --------------------------- Parameter creation ------------------------------ #
def init_params(key, in_channel, out_channel):
    assert in_channel == out_channel, "module's conv2/conv3 need in_channel == out_channel"
    exp = 4
    k1, k2, k3, k4 = jax.random.split(key, 4)
    w1_t = 0.1 * jax.random.normal(k1, (out_channel, in_channel, 1, 1), jnp.float32)
    w2_t = 0.1 * jax.random.normal(k2, (out_channel, in_channel, 3, 3), jnp.float32)
    w3_t = 0.1 * jax.random.normal(k3, (out_channel * exp, in_channel, 1, 1), jnp.float32)
    wd_t = 0.1 * jax.random.normal(k4, (out_channel * exp, in_channel, 1, 1), jnp.float32)

    def affine(c, s):  # deterministic BN gamma / beta
        i = jnp.arange(c, dtype=jnp.float32)
        return 1.0 + 0.05 * s * i, 0.02 * s * i

    g1, b1 = affine(out_channel, 1.0)
    g2, b2 = affine(out_channel, 2.0)
    g3, b3 = affine(out_channel * exp, 3.0)
    gd, bd = affine(out_channel * exp, 4.0)
    return dict(w1_t=w1_t, w2_t=w2_t, w3_t=w3_t, wd_t=wd_t,
                g1=g1, b1=b1, g2=g2, b2=b2, g3=g3, b3=b3, gd=gd, bd=bd)


# ---------------------------------- Main ------------------------------------- #
if __name__ == "__main__":
    N, C, H, W = 2, 4, 16, 16          # in_channel == out_channel == 4, stride=1
    key = jax.random.PRNGKey(0)
    kx, kp = jax.random.split(key)
    x = jax.random.normal(kx, (N, C, H, W), jnp.float32)   # NCHW, like PyTorch
    params = init_params(kp, C, C)

    out = jax.block_until_ready(bottleneck_forward(x, params))

    ref = bottleneck_ref(x, params)
    assert out.shape == (N, 4 * C, H + 2, W + 2), out.shape
    assert jnp.allclose(out, ref, rtol=1e-3, atol=1e-3), "mismatch vs pure-JAX reference"

    print("KERNEL_OK")
</pallas_src>

<mosaic_0001>
module attributes {stable_mosaic.version = 11 : i64} {
  func.func @_bottleneck_kernel(%arg0: memref<4x512xf32, #tpu.memory_space<vmem>>, %arg1: memref<4x4xf32, #tpu.memory_space<vmem>>, %arg2: memref<9x4x4xf32, #tpu.memory_space<vmem>>, %arg3: memref<16x4xf32, #tpu.memory_space<vmem>>, %arg4: memref<16x4xf32, #tpu.memory_space<vmem>>, %arg5: memref<4x1xf32, #tpu.memory_space<vmem>>, %arg6: memref<4x1xf32, #tpu.memory_space<vmem>>, %arg7: memref<4x1xf32, #tpu.memory_space<vmem>>, %arg8: memref<4x1xf32, #tpu.memory_space<vmem>>, %arg9: memref<16x1xf32, #tpu.memory_space<vmem>>, %arg10: memref<16x1xf32, #tpu.memory_space<vmem>>, %arg11: memref<16x1xf32, #tpu.memory_space<vmem>>, %arg12: memref<16x1xf32, #tpu.memory_space<vmem>>, %arg13: memref<4x512xf32, #tpu.memory_space<vmem>>, %arg14: memref<16x512xf32, #tpu.memory_space<vmem>>, %arg15: memref<16x1xf32, #tpu.memory_space<vmem>>) attributes {dimension_semantics = [], scalar_prefetch = 0 : i64, scratch_operands = 0 : i64, tpu.core_type = #tpu.core_type<tc>} {
    %c0 = arith.constant 0 : index
    %c0_0 = arith.constant 0 : index
    %0 = vector.load %arg0[%c0, %c0_0] : memref<4x512xf32, #tpu.memory_space<vmem>>, vector<4x512xf32>
    %c0_1 = arith.constant 0 : index
    %c0_2 = arith.constant 0 : index
    %1 = vector.load %arg13[%c0_1, %c0_2] : memref<4x512xf32, #tpu.memory_space<vmem>>, vector<4x512xf32>
    %c0_3 = arith.constant 0 : index
    %c0_4 = arith.constant 0 : index
    %2 = vector.load %arg4[%c0_3, %c0_4] : memref<16x4xf32, #tpu.memory_space<vmem>>, vector<16x4xf32>
    %cst = arith.constant dense<0.000000e+00> : vector<16x512xf32>
    %3 = tpu.matmul %2, %0, %cst {dimension_numbers = #tpu.dot_dimension_numbers<[1], [0], [0], [1], [0, 0, 1, 1], [], []>} : vector<16x4xf32>, vector<4x512xf32>, vector<16x512xf32> -> vector<16x512xf32>
    %c0_5 = arith.constant 0 : index
    %c0_6 = arith.constant 0 : index
    %4 = vector.load %arg11[%c0_5, %c0_6] : memref<16x1xf32, #tpu.memory_space<vmem>>, vector<16x1xf32>
    %c0_7 = arith.constant 0 : index
    %c0_8 = arith.constant 0 : index
    %5 = vector.load %arg12[%c0_7, %c0_8] : memref<16x1xf32, #tpu.memory_space<vmem>>, vector<16x1xf32>
    %cst_9 = arith.constant dense<0.000000e+00> : vector<16xf32>
    %6 = vector.multi_reduction <add>, %3, %cst_9 [1] : vector<16x512xf32> to vector<16xf32>
    %7 = vector.shape_cast %6 : vector<16xf32> to vector<16x1xf32>
    %cst_10 = arith.constant 6.480000e+02 : f32
    %8 = vector.broadcast %cst_10 : f32 to vector<16x1xf32>
    %9 = arith.divf %7, %8 : vector<16x1xf32>
    %10 = vector.broadcast %9 : vector<16x1xf32> to vector<16x512xf32>
    %11 = arith.subf %3, %10 : vector<16x512xf32>
    %12 = arith.mulf %11, %11 : vector<16x512xf32>
    %cst_11 = arith.constant dense<0.000000e+00> : vector<16xf32>
    %13 = vector.multi_reduction <add>, %12, %cst_11 [1] : vector<16x512xf32> to vector<16xf32>
    %14 = vector.shape_cast %13 : vector<16xf32> to vector<16x1xf32>
    %cst_12 = arith.constant 1.360000e+02 : f32
    %15 = vector.broadcast %cst_12 : f32 to vector<16x1xf32>
    %16 = arith.mulf %15, %9 : vector<16x1xf32>
    %17 = arith.mulf %16, %9 : vector<16x1xf32>
    %18 = arith.addf %14, %17 : vector<16x1xf32>
    %cst_13 = arith.constant 6.480000e+02 : f32
    %19 = vector.broadcast %cst_13 : f32 to vector<16x1xf32>
    %20 = arith.divf %18, %19 : vector<16x1xf32>
    %cst_14 = arith.constant 9.99999974E-6 : f32
    %21 = vector.broadcast %cst_14 : f32 to vector<16x1xf32>
    %22 = arith.addf %20, %21 : vector<16x1xf32>
    %23 = math.rsqrt %22 : vector<16x1xf32>
    %24 = arith.mulf %4, %23 : vector<16x1xf32>
    %25 = arith.mulf %9, %24 : vector<16x1xf32>
    %26 = arith.subf %5, %25 : vector<16x1xf32>
    %27 = vector.broadcast %24 : vector<16x1xf32> to vector<16x512xf32>
    %28 = arith.mulf %3, %27 : vector<16x512xf32>
    %29 = vector.broadcast %26 : vector<16x1xf32> to vector<16x512xf32>
    %30 = arith.addf %28, %29 : vector<16x512xf32>
    %c0_15 = arith.constant 0 : index
    %c0_16 = arith.constant 0 : index
    %31 = vector.load %arg1[%c0_15, %c0_16] : memref<4x4xf32, #tpu.memory_space<vmem>>, vector<4x4xf32>
    %cst_17 = arith.constant dense<0.000000e+00> : vector<4x512xf32>
    %32 = tpu.matmul %31, %0, %cst_17 {dimension_numbers = #tpu.dot_dimension_numbers<[1], [0], [0], [1], [0, 0, 1, 1], [], []>} : vector<4x4xf32>, vector<4x512xf32>, vector<4x512xf32> -> vector<4x512xf32>
    %c0_18 = arith.constant 0 : index
    %c0_19 = arith.constant 0 : index
    %33 = vector.load %arg5[%c0_18, %c0_19] : memref<4x1xf32, #tpu.memory_space<vmem>>, vector<4x1xf32>
    %c0_20 = arith.constant 0 : index
    %c0_21 = arith.constant 0 : index
    %34 = vector.load %arg6[%c0_20, %c0_21] : memref<4x1xf32, #tpu.memory_space<vmem>>, vector<4x1xf32>
    %cst_22 = arith.constant dense<0.000000e+00> : vector<4xf32>
    %35 = vector.multi_reduction <add>, %32, %cst_22 [1] : vector<4x512xf32> to vector<4xf32>
    %36 = vector.shape_cast %35 : vector<4xf32> to vector<4x1xf32>
    %cst_23 = arith.constant 5.120000e+02 : f32
    %37 = vector.broadcast %cst_23 : f32 to vector<4x1xf32>
    %38 = arith.divf %36, %37 : vector<4x1xf32>
    %39 = vector.broadcast %38 : vector<4x1xf32> to vector<4x512xf32>
    %40 = arith.subf %32, %39 : vector<4x512xf32>
    %41 = arith.mulf %40, %40 : vector<4x512xf32>
    %cst_24 = arith.constant dense<0.000000e+00> : vector<4xf32>
    %42 = vector.multi_reduction <add>, %41, %cst_24 [1] : vector<4x512xf32> to vector<4xf32>
    %43 = vector.shape_cast %42 : vector<4xf32> to vector<4x1xf32>
    %cst_25 = arith.constant 0.000000e+00 : f32
    %44 = vector.broadcast %cst_25 : f32 to vector<4x1xf32>
    %45 = arith.mulf %44, %38 : vector<4x1xf32>
    %46 = arith.mulf %45, %38 : vector<4x1xf32>
    %47 = arith.addf %43, %46 : vector<4x1xf32>
    %cst_26 = arith.constant 5.120000e+02 : f32
    %48 = vector.broadcast %cst_26 : f32 to vector<4x1xf32>
    %49 = arith.divf %47, %48 : vector<4x1xf32>
    %cst_27 = arith.constant 9.99999974E-6 : f32
    %50 = vector.broadcast %cst_27 : f32 to vector<4x1xf32>
    %51 = arith.addf %49, %50 : vector<4x1xf32>
    %52 = math.rsqrt %51 : vector<4x1xf32>
    %53 = arith.mulf %33, %52 : vector<4x1xf32>
    %54 = arith.mulf %38, %53 : vector<4x1xf32>
    %55 = arith.subf %34, %54 : vector<4x1xf32>
    %56 = vector.broadcast %53 : vector<4x1xf32> to vector<4x512xf32>
    %57 = arith.mulf %32, %56 : vector<4x512xf32>
    %58 = vector.broadcast %55 : vector<4x1xf32> to vector<4x512xf32>
    %59 = arith.addf %57, %58 : vector<4x512xf32>
    %cst_28 = arith.constant 0.000000e+00 : f32
    %60 = vector.broadcast %cst_28 : f32 to vector<4x512xf32>
    %61 = arith.maximumf %59, %60 : vector<4x512xf32>
    %62 = vector.extract_strided_slice %61 {offsets = [0, 495], sizes = [4, 17], strides = [1, 1]} : vector<4x512xf32> to vector<4x17xf32>
    %63 = vector.extract_strided_slice %61 {offsets = [0, 0], sizes = [4, 495], strides = [1, 1]} : vector<4x512xf32> to vector<4x495xf32>
    %64 = tpu.concatenate %62, %63 in 1 : vector<4x17xf32>, vector<4x495xf32> -> vector<4x512xf32>
    %65 = vector.extract_strided_slice %1 {offsets = [0, 0], sizes = [1, 512], strides = [1, 1]} : vector<4x512xf32> to vector<1x512xf32>
    %66 = vector.broadcast %65 : vector<1x512xf32> to vector<4x512xf32>
    %67 = arith.mulf %64, %66 : vector<4x512xf32>
    %68 = vector.extract_strided_slice %1 {offsets = [2, 0], sizes = [1, 512], strides = [1, 1]} : vector<4x512xf32> to vector<1x512xf32>
    %69 = vector.broadcast %68 : vector<1x512xf32> to vector<4x512xf32>
    %70 = arith.mulf %67, %69 : vector<4x512xf32>
    %c0_29 = arith.constant 0 : index
    %c0_30 = arith.constant 0 : index
    %c0_31 = arith.constant 0 : index
    %71 = vector.load %arg2[%c0_29, %c0_30, %c0_31] : memref<9x4x4xf32, #tpu.memory_space<vmem>>, vector<1x4x4xf32>
    %72 = vector.shape_cast %71 : vector<1x4x4xf32> to vector<4x4xf32>
    %cst_32 = arith.constant dense<0.000000e+00> : vector<4x512xf32>
    %73 = tpu.matmul %72, %70, %cst_32 {dimension_numbers = #tpu.dot_dimension_numbers<[1], [0], [0], [1], [0, 0, 1, 1], [], []>} : vector<4x4xf32>, vector<4x512xf32>, vector<4x512xf32> -> vector<4x512xf32>
    %74 = vector.extract_strided_slice %61 {offsets = [0, 496], sizes = [4, 16], strides = [1, 1]} : vector<4x512xf32> to vector<4x16xf32>
    %75 = vector.extract_strided_slice %61 {offsets = [0, 0], sizes = [4, 496], strides = [1, 1]} : vector<4x512xf32> to vector<4x496xf32>
    %76 = tpu.concatenate %74, %75 in 1 : vector<4x16xf32>, vector<4x496xf32> -> vector<4x512xf32>
    %77 = vector.extract_strided_slice %1 {offsets = [0, 0], sizes = [1, 512], strides = [1, 1]} : vector<4x512xf32> to vector<1x512xf32>
    %78 = vector.broadcast %77 : vector<1x512xf32> to vector<4x512xf32>
    %79 = arith.mulf %76, %78 : vector<4x512xf32>
    %c1 = arith.constant 1 : index
    %c0_33 = arith.constant 0 : index
    %c0_34 = arith.constant 0 : index
    %80 = vector.load %arg2[%c1, %c0_33, %c0_34] : memref<9x4x4xf32, #tpu.memory_space<vmem>>, vector<1x4x4xf32>
    %81 = vector.shape_cast %80 : vector<1x4x4xf32> to vector<4x4xf32>
    %cst_35 = arith.constant dense<0.000000e+00> : vector<4x512xf32>
    %82 = tpu.matmul %81, %79, %cst_35 {dimension_numbers = #tpu.dot_dimension_numbers<[1], [0], [0], [1], [0, 0, 1, 1], [], []>} : vector<4x4xf32>, vector<4x512xf32>, vector<4x512xf32> -> vector<4x512xf32>
    %83 = arith.addf %73, %82 : vector<4x512xf32>
    %84 = vector.extract_strided_slice %61 {offsets = [0, 497], sizes = [4, 15], strides = [1, 1]} : vector<4x512xf32> to vector<4x15xf32>
    %85 = vector.extract_strided_slice %61 {offsets = [0, 0], sizes = [4, 497], strides = [1, 1]} : vector<4x512xf32> to vector<4x497xf32>
    %86 = tpu.concatenate %84, %85 in 1 : vector<4x15xf32>, vector<4x497xf32> -> vector<4x512xf32>
    %87 = vector.extract_strided_slice %1 {offsets = [0, 0], sizes = [1, 512], strides = [1, 1]} : vector<4x512xf32> to vector<1x512xf32>
    %88 = vector.broadcast %87 : vector<1x512xf32> to vector<4x512xf32>
    %89 = arith.mulf %86, %88 : vector<4x512xf32>
    %90 = vector.extract_strided_slice %1 {offsets = [3, 0], sizes = [1, 512], strides = [1, 1]} : vector<4x512xf32> to vector<1x512xf32>
    %91 = vector.broadcast %90 : vector<1x512xf32> to vector<4x512xf32>
    %92 = arith.mulf %89, %91 : vector<4x512xf32>
    %c2 = arith.constant 2 : index
    %c0_36 = arith.constant 0 : index
    %c0_37 = arith.constant 0 : index
    %93 = vector.load %arg2[%c2, %c0_36, %c0_37] : memref<9x4x4xf32, #tpu.memory_space<vmem>>, vector<1x4x4xf32>
    %94 = vector.shape_cast %93 : vector<1x4x4xf32> to vector<4x4xf32>
    %cst_38 = arith.constant dense<0.000000e+00> : vector<4x512xf32>
    %95 = tpu.matmul %94, %92, %cst_38 {dimension_numbers = #tpu.dot_dimension_numbers<[1], [0], [0], [1], [0, 0, 1, 1], [], []>} : vector<4x4xf32>, vector<4x512xf32>, vector<4x512xf32> -> vector<4x512xf32>
    %96 = arith.addf %83, %95 : vector<4x512xf32>
    %97 = vector.extract_strided_slice %61 {offsets = [0, 511], sizes = [4, 1], strides = [1, 1]} : vector<4x512xf32> to vector<4x1xf32>
    %98 = vector.extract_strided_slice %61 {offsets = [0, 0], sizes = [4, 511], strides = [1, 1]} : vector<4x512xf32> to vector<4x511xf32>
    %99 = tpu.concatenate %97, %98 in 1 : vector<4x1xf32>, vector<4x511xf32> -> vector<4x512xf32>
    %100 = vector.extract_strided_slice %1 {offsets = [2, 0], sizes = [1, 512], strides = [1, 1]} : vector<4x512xf32> to vector<1x512xf32>
    %101 = vector.broadcast %100 : vector<1x512xf32> to vector<4x512xf32>
    %102 = arith.mulf %99, %101 : vector<4x512xf32>
    %c3 = arith.constant 3 : index
    %c0_39 = arith.constant 0 : index
    %c0_40 = arith.constant 0 : index
    %103 = vector.load %arg2[%c3, %c0_39, %c0_40] : memref<9x4x4xf32, #tpu.memory_space<vmem>>, vector<1x4x4xf32>
    %104 = vector.shape_cast %103 : vector<1x4x4xf32> to vector<4x4xf32>
    %cst_41 = arith.constant dense<0.000000e+00> : vector<4x512xf32>
    %105 = tpu.matmul %104, %102, %cst_41 {dimension_numbers = #tpu.dot_dimension_numbers<[1], [0], [0], [1], [0, 0, 1, 1], [], []>} : vector<4x4xf32>, vector<4x512xf32>, vector<4x512xf32> -> vector<4x512xf32>
    %106 = arith.addf %96, %105 : vector<4x512xf32>
    %c4 = arith.constant 4 : index
    %c0_42 = arith.constant 0 : index
    %c0_43 = arith.constant 0 : index
    %107 = vector.load %arg2[%c4, %c0_42, %c0_43] : memref<9x4x4xf32, #tpu.memory_space<vmem>>, vector<1x4x4xf32>
    %108 = vector.shape_cast %107 : vector<1x4x4xf32> to vector<4x4xf32>
    %cst_44 = arith.constant dense<0.000000e+00> : vector<4x512xf32>
    %109 = tpu.matmul %108, %61, %cst_44 {dimension_numbers = #tpu.dot_dimension_numbers<[1], [0], [0], [1], [0, 0, 1, 1], [], []>} : vector<4x4xf32>, vector<4x512xf32>, vector<4x512xf32> -> vector<4x512xf32>
    %110 = arith.addf %106, %109 : vector<4x512xf32>
    %111 = vector.extract_strided_slice %61 {offsets = [0, 1], sizes = [4, 511], strides = [1, 1]} : vector<4x512xf32> to vector<4x511xf32>
    %112 = vector.extract_strided_slice %61 {offsets = [0, 0], sizes = [4, 1], strides = [1, 1]} : vector<4x512xf32> to vector<4x1xf32>
    %113 = tpu.concatenate %111, %112 in 1 : vector<4x511xf32>, vector<4x1xf32> -> vector<4x512xf32>
    %114 = vector.extract_strided_slice %1 {offsets = [3, 0], sizes = [1, 512], strides = [1, 1]} : vector<4x512xf32> to vector<1x512xf32>
    %115 = vector.broadcast %114 : vector<1x512xf32> to vector<4x512xf32>
    %116 = arith.mulf %113, %115 : vector<4x512xf32>
    %c5 = arith.constant 5 : index
    %c0_45 = arith.constant 0 : index
    %c0_46 = arith.constant 0 : index
    %117 = vector.load %arg2[%c5, %c0_45, %c0_46] : memref<9x4x4xf32, #tpu.memory_space<vmem>>, vector<1x4x4xf32>
    %118 = vector.shape_cast %117 : vector<1x4x4xf32> to vector<4x4xf32>
    %cst_47 = arith.constant dense<0.000000e+00> : vector<4x512xf32>
    %119 = tpu.matmul %118, %116, %cst_47 {dimension_numbers = #tpu.dot_dimension_numbers<[1], [0], [0], [1], [0, 0, 1, 1], [], []>} : vector<4x4xf32>, vector<4x512xf32>, vector<4x512xf32> -> vector<4x512xf32>
    %120 = arith.addf %110, %119 : vector<4x512xf32>
    %121 = vector.extract_strided_slice %61 {offsets = [0, 15], sizes = [4, 497], strides = [1, 1]} : vector<4x512xf32> to vector<4x497xf32>
    %122 = vector.extract_strided_slice %61 {offsets = [0, 0], sizes = [4, 15], strides = [1, 1]} : vector<4x512xf32> to vector<4x15xf32>
    %123 = tpu.concatenate %121, %122 in 1 : vector<4x497xf32>, vector<4x15xf32> -> vector<4x512xf32>
    %124 = vector.extract_strided_slice %1 {offsets = [1, 0], sizes = [1, 512], strides = [1, 1]} : vector<4x512xf32> to vector<1x512xf32>
    %125 = vector.broadcast %124 : vector<1x512xf32> to vector<4x512xf32>
    %126 = arith.mulf %123, %125 : vector<4x512xf32>
    %127 = vector.extract_strided_slice %1 {offsets = [2, 0], sizes = [1, 512], strides = [1, 1]} : vector<4x512xf32> to vector<1x512xf32>
    %128 = vector.broadcast %127 : vector<1x512xf32> to vector<4x512xf32>
    %129 = arith.mulf %126, %128 : vector<4x512xf32>
    %c6 = arith.constant 6 : index
    %c0_48 = arith.constant 0 : index
    %c0_49 = arith.constant 0 : index
    %130 = vector.load %arg2[%c6, %c0_48, %c0_49] : memref<9x4x4xf32, #tpu.memory_space<vmem>>, vector<1x4x4xf32>
    %131 = vector.shape_cast %130 : vector<1x4x4xf32> to vector<4x4xf32>
    %cst_50 = arith.constant dense<0.000000e+00> : vector<4x512xf32>
    %132 = tpu.matmul %131, %129, %cst_50 {dimension_numbers = #tpu.dot_dimension_numbers<[1], [0], [0], [1], [0, 0, 1, 1], [], []>} : vector<4x4xf32>, vector<4x512xf32>, vector<4x512xf32> -> vector<4x512xf32>
    %133 = arith.addf %120, %132 : vector<4x512xf32>
    %134 = vector.extract_strided_slice %61 {offsets = [0, 16], sizes = [4, 496], strides = [1, 1]} : vector<4x512xf32> to vector<4x496xf32>
    %135 = vector.extract_strided_slice %61 {offsets = [0, 0], sizes = [4, 16], strides = [1, 1]} : vector<4x512xf32> to vector<4x16xf32>
    %136 = tpu.concatenate %134, %135 in 1 : vector<4x496xf32>, vector<4x16xf32> -> vector<4x512xf32>
    %137 = vector.extract_strided_slice %1 {offsets = [1, 0], sizes = [1, 512], strides = [1, 1]} : vector<4x512xf32> to vector<1x512xf32>
    %138 = vector.broadcast %137 : vector<1x512xf32> to vector<4x512xf32>
    %139 = arith.mulf %136, %138 : vector<4x512xf32>
    %c7 = arith.constant 7 : index
    %c0_51 = arith.constant 0 : index
    %c0_52 = arith.constant 0 : index
    %140 = vector.load %arg2[%c7, %c0_51, %c0_52] : memref<9x4x4xf32, #tpu.memory_space<vmem>>, vector<1x4x4xf32>
    %141 = vector.shape_cast %140 : vector<1x4x4xf32> to vector<4x4xf32>
    %cst_53 = arith.constant dense<0.000000e+00> : vector<4x512xf32>
    %142 = tpu.matmul %141, %139, %cst_53 {dimension_numbers = #tpu.dot_dimension_numbers<[1], [0], [0], [1], [0, 0, 1, 1], [], []>} : vector<4x4xf32>, vector<4x512xf32>, vector<4x512xf32> -> vector<4x512xf32>
    %143 = arith.addf %133, %142 : vector<4x512xf32>
    %144 = vector.extract_strided_slice %61 {offsets = [0, 17], sizes = [4, 495], strides = [1, 1]} : vector<4x512xf32> to vector<4x495xf32>
    %145 = vector.extract_strided_slice %61 {offsets = [0, 0], sizes = [4, 17], strides = [1, 1]} : vector<4x512xf32> to vector<4x17xf32>
    %146 = tpu.concatenate %144, %145 in 1 : vector<4x495xf32>, vector<4x17xf32> -> vector<4x512xf32>
    %147 = vector.extract_strided_slice %1 {offsets = [1, 0], sizes = [1, 512], strides = [1, 1]} : vector<4x512xf32> to vector<1x512xf32>
    %148 = vector.broadcast %147 : vector<1x512xf32> to vector<4x512xf32>
    %149 = arith.mulf %146, %148 : vector<4x512xf32>
    %150 = vector.extract_strided_slice %1 {offsets = [3, 0], sizes = [1, 512], strides = [1, 1]} : vector<4x512xf32> to vector<1x512xf32>
    %151 = vector.broadcast %150 : vector<1x512xf32> to vector<4x512xf32>
    %152 = arith.mulf %149, %151 : vector<4x512xf32>
    %c8 = arith.constant 8 : index
    %c0_54 = arith.constant 0 : index
    %c0_55 = arith.constant 0 : index
    %153 = vector.load %arg2[%c8, %c0_54, %c0_55] : memref<9x4x4xf32, #tpu.memory_space<vmem>>, vector<1x4x4xf32>
    %154 = vector.shape_cast %153 : vector<1x4x4xf32> to vector<4x4xf32>
    %cst_56 = arith.constant dense<0.000000e+00> : vector<4x512xf32>
    %155 = tpu.matmul %154, %152, %cst_56 {dimension_numbers = #tpu.dot_dimension_numbers<[1], [0], [0], [1], [0, 0, 1, 1], [], []>} : vector<4x4xf32>, vector<4x512xf32>, vector<4x512xf32> -> vector<4x512xf32>
    %156 = arith.addf %143, %155 : vector<4x512xf32>
    %c0_57 = arith.constant 0 : index
    %c0_58 = arith.constant 0 : index
    %157 = vector.load %arg7[%c0_57, %c0_58] : memref<4x1xf32, #tpu.memory_space<vmem>>, vector<4x1xf32>
    %c0_59 = arith.constant 0 : index
    %c0_60 = arith.constant 0 : index
    %158 = vector.load %arg8[%c0_59, %c0_60] : memref<4x1xf32, #tpu.memory_space<vmem>>, vector<4x1xf32>
    %cst_61 = arith.constant dense<0.000000e+00> : vector<4xf32>
    %159 = vector.multi_reduction <add>, %156, %cst_61 [1] : vector<4x512xf32> to vector<4xf32>
    %160 = vector.shape_cast %159 : vector<4xf32> to vector<4x1xf32>
    %cst_62 = arith.constant 5.120000e+02 : f32
    %161 = vector.broadcast %cst_62 : f32 to vector<4x1xf32>
    %162 = arith.divf %160, %161 : vector<4x1xf32>
    %163 = vector.broadcast %162 : vector<4x1xf32> to vector<4x512xf32>
    %164 = arith.subf %156, %163 : vector<4x512xf32>
    %165 = arith.mulf %164, %164 : vector<4x512xf32>
    %cst_63 = arith.constant dense<0.000000e+00> : vector<4xf32>
    %166 = vector.multi_reduction <add>, %165, %cst_63 [1] : vector<4x512xf32> to vector<4xf32>
    %167 = vector.shape_cast %166 : vector<4xf32> to vector<4x1xf32>
    %cst_64 = arith.constant 0.000000e+00 : f32
    %168 = vector.broadcast %cst_64 : f32 to vector<4x1xf32>
    %169 = arith.mulf %168, %162 : vector<4x1xf32>
    %170 = arith.mulf %169, %162 : vector<4x1xf32>
    %171 = arith.addf %167, %170 : vector<4x1xf32>
    %cst_65 = arith.constant 5.120000e+02 : f32
    %172 = vector.broadcast %cst_65 : f32 to vector<4x1xf32>
    %173 = arith.divf %171, %172 : vector<4x1xf32>
    %cst_66 = arith.constant 9.99999974E-6 : f32
    %174 = vector.broadcast %cst_66 : f32 to vector<4x1xf32>
    %175 = arith.addf %173, %174 : vector<4x1xf32>
    %176 = math.rsqrt %175 : vector<4x1xf32>
    %177 = arith.mulf %157, %176 : vector<4x1xf32>
    %178 = arith.mulf %162, %177 : vector<4x1xf32>
    %179 = arith.subf %158, %178 : vector<4x1xf32>
    %180 = vector.broadcast %177 : vector<4x1xf32> to vector<4x512xf32>
    %181 = arith.mulf %156, %180 : vector<4x512xf32>
    %182 = vector.broadcast %179 : vector<4x1xf32> to vector<4x512xf32>
    %183 = arith.addf %181, %182 : vector<4x512xf32>
    %cst_67 = arith.constant 0.000000e+00 : f32
    %184 = vector.broadcast %cst_67 : f32 to vector<4x512xf32>
    %185 = arith.maximumf %183, %184 : vector<4x512xf32>
    %c0_68 = arith.constant 0 : index
    %c0_69 = arith.constant 0 : index
    %186 = vector.load %arg3[%c0_68, %c0_69] : memref<16x4xf32, #tpu.memory_space<vmem>>, vector<16x4xf32>
    %cst_70 = arith.constant dense<0.000000e+00> : vector<16x512xf32>
    %187 = tpu.matmul %186, %185, %cst_70 {dimension_numbers = #tpu.dot_dimension_numbers<[1], [0], [0], [1], [0, 0, 1, 1], [], []>} : vector<16x4xf32>, vector<4x512xf32>, vector<16x512xf32> -> vector<16x512xf32>
    %c0_71 = arith.constant 0 : index
    %c0_72 = arith.constant 0 : index
    %188 = vector.load %arg9[%c0_71, %c0_72] : memref<16x1xf32, #tpu.memory_space<vmem>>, vector<16x1xf32>
    %c0_73 = arith.constant 0 : index
    %c0_74 = arith.constant 0 : index
    %189 = vector.load %arg10[%c0_73, %c0_74] : memref<16x1xf32, #tpu.memory_space<vmem>>, vector<16x1xf32>
    %cst_75 = arith.constant dense<0.000000e+00> : vector<16xf32>
    %190 = vector.multi_reduction <add>, %187, %cst_75 [1] : vector<16x512xf32> to vector<16xf32>
    %191 = vector.shape_cast %190 : vector<16xf32> to vector<16x1xf32>
    %cst_76 = arith.constant 6.480000e+02 : f32
    %192 = vector.broadcast %cst_76 : f32 to vector<16x1xf32>
    %193 = arith.divf %191, %192 : vector<16x1xf32>
    %194 = vector.broadcast %193 : vector<16x1xf32> to vector<16x512xf32>
    %195 = arith.subf %187, %194 : vector<16x512xf32>
    %196 = arith.mulf %195, %195 : vector<16x512xf32>
    %cst_77 = arith.constant dense<0.000000e+00> : vector<16xf32>
    %197 = vector.multi_reduction <add>, %196, %cst_77 [1] : vector<16x512xf32> to vector<16xf32>
    %198 = vector.shape_cast %197 : vector<16xf32> to vector<16x1xf32>
    %cst_78 = arith.constant 1.360000e+02 : f32
    %199 = vector.broadcast %cst_78 : f32 to vector<16x1xf32>
    %200 = arith.mulf %199, %193 : vector<16x1xf32>
    %201 = arith.mulf %200, %193 : vector<16x1xf32>
    %202 = arith.addf %198, %201 : vector<16x1xf32>
    %cst_79 = arith.constant 6.480000e+02 : f32
    %203 = vector.broadcast %cst_79 : f32 to vector<16x1xf32>
    %204 = arith.divf %202, %203 : vector<16x1xf32>
    %cst_80 = arith.constant 9.99999974E-6 : f32
    %205 = vector.broadcast %cst_80 : f32 to vector<16x1xf32>
    %206 = arith.addf %204, %205 : vector<16x1xf32>
    %207 = math.rsqrt %206 : vector<16x1xf32>
    %208 = arith.mulf %188, %207 : vector<16x1xf32>
    %209 = arith.mulf %193, %208 : vector<16x1xf32>
    %210 = arith.subf %189, %209 : vector<16x1xf32>
    %211 = vector.broadcast %208 : vector<16x1xf32> to vector<16x512xf32>
    %212 = arith.mulf %187, %211 : vector<16x512xf32>
    %213 = vector.broadcast %210 : vector<16x1xf32> to vector<16x512xf32>
    %214 = arith.addf %212, %213 : vector<16x512xf32>
    %215 = arith.addf %214, %30 : vector<16x512xf32>
    %cst_81 = arith.constant 0.000000e+00 : f32
    %216 = vector.broadcast %cst_81 : f32 to vector<16x512xf32>
    %217 = arith.maximumf %215, %216 : vector<16x512xf32>
    %c0_82 = arith.constant 0 : index
    %c0_83 = arith.constant 0 : index
    %218 = vector.load %arg14[%c0_82, %c0_83] : memref<16x512xf32, #tpu.memory_space<vmem>>, vector<16x512xf32>
    tpu.vector_store %arg14[%c0_82, %c0_83], %217 {strides = array<i32>} : memref<16x512xf32, #tpu.memory_space<vmem>>, vector<16x512xf32>,
    %219 = arith.addf %210, %26 : vector<16x1xf32>
    %cst_84 = arith.constant 0.000000e+00 : f32
    %220 = vector.broadcast %cst_84 : f32 to vector<16x1xf32>
    %221 = arith.maximumf %219, %220 : vector<16x1xf32>
    %c0_85 = arith.constant 0 : index
    %c0_86 = arith.constant 0 : index
    %222 = vector.load %arg15[%c0_85, %c0_86] : memref<16x1xf32, #tpu.memory_space<vmem>>, vector<16x1xf32>
    tpu.vector_store %arg15[%c0_85, %c0_86], %221 {strides = array<i32>} : memref<16x1xf32, #tpu.memory_space<vmem>>, vector<16x1xf32>,
    return
  }
}

</mosaic_0001>

<llo_original>
// kernel: tpu_custom_call.1
$region0: #{tpu_custom_call.1}
  #allocation0 [shape = 'u32[]', space=smem, size = 0x4, offset = 0x4, fixed_abs, tag = 'smem constant byte address 0x4 - core index']
  #allocation1 [shape = 'u32[144,128]{1,0:T(1,128)}', space=vmem, size = 0x12000, scoped, tag = 'internal scratch']
  %s0 = inlined_call_operand.vmem [shape: f32[4,512], index: 0, kind: input, shape index: {}]
  %s1 = inlined_call_operand.vmem [shape: f32[4,4], index: 1, kind: input, shape index: {}]
  %s2 = inlined_call_operand.vmem [shape: f32[9,4,4], index: 2, kind: input, shape index: {}]
  %s3 = inlined_call_operand.vmem [shape: f32[16,4], index: 3, kind: input, shape index: {}]
  %s4 = inlined_call_operand.vmem [shape: f32[16,4], index: 4, kind: input, shape index: {}]
  %s5 = inlined_call_operand.vmem [shape: f32[4,1], index: 5, kind: input, shape index: {}]
  %s6 = inlined_call_operand.vmem [shape: f32[4,1], index: 6, kind: input, shape index: {}]
  %s7 = inlined_call_operand.vmem [shape: f32[4,1], index: 7, kind: input, shape index: {}]
  %s8 = inlined_call_operand.vmem [shape: f32[4,1], index: 8, kind: input, shape index: {}]
  %s9 = inlined_call_operand.vmem [shape: f32[16,1], index: 9, kind: input, shape index: {}]
  %s10 = inlined_call_operand.vmem [shape: f32[16,1], index: 10, kind: input, shape index: {}]
  %s11 = inlined_call_operand.vmem [shape: f32[16,1], index: 11, kind: input, shape index: {}]
  %s12 = inlined_call_operand.vmem [shape: f32[16,1], index: 12, kind: input, shape index: {}]
  %s13 = inlined_call_operand.vmem [shape: f32[4,512], index: 13, kind: input, shape index: {}]
  %s14 = inlined_call_operand.hbm [shape: f32[16,512], index: 14, kind: output, shape index: {0}]
  %s15 = inlined_call_operand.vmem [shape: f32[16,1], index: 15, kind: output, shape index: {1}]
  %16 = xla_tuple %s14, %s15
  %s17 = sld [smem:[#allocation0]]
  $region74: #{tpu_custom_call.1} parent=0
    _
  %s19 = ssub.s32 1, %s17
  %s20 = scalar_select 0, %s19, %s17
  $region1: #{tpu_custom_call.1} parent=0
    #allocation2 [shape = 'u8[32768]{0}', space=vmem, size = 0x8000, scoped, tag = 'output window, operand 0, single buffered']
    #allocation3 [shape = 's32[1]{0}', space=sflag, size = 0x4, scoped, tag = 'scoped memory for tpu_custom_call.1']
    %21 = vsyncpa [#allocation3], 0
    // Predicated region
    $region2: #{tpu_custom_call.1} parent=1 // pred_check
      _
    $region3: #{tpu_custom_call.1} parent=1 // pred_check_branch
      %23 = sbr.rel (0) target = $region5
    $region4: #{tpu_custom_call.1} parent=1 // pred_region
      _
    $region5: #{tpu_custom_call.1} parent=1 // pred_fallthru
      _
    // Predicated region
    $region6: #{tpu_custom_call.1} parent=1 // pred_check
      _
    $region7: #{tpu_custom_call.1} parent=1 // pred_check_branch
      %25 = sbr.rel (0) target = $region9
    $region8: #{tpu_custom_call.1} parent=1 // pred_region
      _
    $region9: #{tpu_custom_call.1} parent=1 // pred_fallthru
      _
    // Predicated region
    $region10: #{tpu_custom_call.1} parent=1 // pred_check
      _
    $region11: #{tpu_custom_call.1} parent=1 // pred_check_branch
      %27 = sbr.rel (0) target = $region13
    $region12: #{tpu_custom_call.1} parent=1 // pred_region
      _
    $region13: #{tpu_custom_call.1} parent=1 // pred_fallthru
      _
    // Predicated region
    $region14: #{tpu_custom_call.1} parent=1 // pred_check
      _
    $region15: #{tpu_custom_call.1} parent=1 // pred_check_branch
      %29 = sbr.rel (0) target = $region17
    $region16: #{tpu_custom_call.1} parent=1 // pred_region
      _
    $region17: #{tpu_custom_call.1} parent=1 // pred_fallthru
      _
    // Predicated region
    $region18: #{tpu_custom_call.1} parent=1 // pred_check
      _
    $region19: #{tpu_custom_call.1} parent=1 // pred_check_branch
      %31 = sbr.rel (0) target = $region21
    $region20: #{tpu_custom_call.1} parent=1 // pred_region
      _
    $region21: #{tpu_custom_call.1} parent=1 // pred_fallthru
      _
    // Predicated region
    $region22: #{tpu_custom_call.1} parent=1 // pred_check
      _
    $region23: #{tpu_custom_call.1} parent=1 // pred_check_branch
      %33 = sbr.rel (0) target = $region25
    $region24: #{tpu_custom_call.1} parent=1 // pred_region
      _
    $region25: #{tpu_custom_call.1} parent=1 // pred_fallthru
      _
    // Predicated region
    $region26: #{tpu_custom_call.1} parent=1 // pred_check
      _
    $region27: #{tpu_custom_call.1} parent=1 // pred_check_branch
      %35 = sbr.rel (0) target = $region29
    $region28: #{tpu_custom_call.1} parent=1 // pred_region
      _
    $region29: #{tpu_custom_call.1} parent=1 // pred_fallthru
      _
    // Predicated region
    $region30: #{tpu_custom_call.1} parent=1 // pred_check
      _
    $region31: #{tpu_custom_call.1} parent=1 // pred_check_branch
      %37 = sbr.rel (0) target = $region33
    $region32: #{tpu_custom_call.1} parent=1 // pred_region
      _
    $region33: #{tpu_custom_call.1} parent=1 // pred_fallthru
      _
    // Predicated region
    $region34: #{tpu_custom_call.1} parent=1 // pred_check
      _
    $region35: #{tpu_custom_call.1} parent=1 // pred_check_branch
      %39 = sbr.rel (0) target = $region37
    $region36: #{tpu_custom_call.1} parent=1 // pred_region
      _
    $region37: #{tpu_custom_call.1} parent=1 // pred_fallthru
      _
    // Predicated region
    $region38: #{tpu_custom_call.1} parent=1 // pred_check
      _
    $region39: #{tpu_custom_call.1} parent=1 // pred_check_branch
      %41 = sbr.rel (0) target = $region41
    $region40: #{tpu_custom_call.1} parent=1 // pred_region
      _
    $region41: #{tpu_custom_call.1} parent=1 // pred_fallthru
      _
    // Predicated region
    $region42: #{tpu_custom_call.1} parent=1 // pred_check
      _
    $region43: #{tpu_custom_call.1} parent=1 // pred_check_branch
      %43 = sbr.rel (0) target = $region45
    $region44: #{tpu_custom_call.1} parent=1 // pred_region
      _
    $region45: #{tpu_custom_call.1} parent=1 // pred_fallthru
      _
    // Predicated region
    $region46: #{tpu_custom_call.1} parent=1 // pred_check
      _
    $region47: #{tpu_custom_call.1} parent=1 // pred_check_branch
      %45 = sbr.rel (0) target = $region49
    $region48: #{tpu_custom_call.1} parent=1 // pred_region
      _
    $region49: #{tpu_custom_call.1} parent=1 // pred_fallthru
      _
    // Predicated region
    $region50: #{tpu_custom_call.1} parent=1 // pred_check
      _
    $region51: #{tpu_custom_call.1} parent=1 // pred_check_branch
      %47 = sbr.rel (0) target = $region53
    $region52: #{tpu_custom_call.1} parent=1 // pred_region
      _
    $region53: #{tpu_custom_call.1} parent=1 // pred_fallthru
      _
    // Predicated region
    $region54: #{tpu_custom_call.1} parent=1 // pred_check
      _
    $region55: #{tpu_custom_call.1} parent=1 // pred_check_branch
      %49 = sbr.rel (0) target = $region57
    $region56: #{tpu_custom_call.1} parent=1 // pred_region
      _
    $region57: #{tpu_custom_call.1} parent=1 // pred_fallthru
      _
    %v50 = vld [vmem:[%s0] sm:$0xff]
    %v51 = vld [vmem:[%s0 + $0x8] sm:$0xff]
    %v52 = vld [vmem:[%s13] sm:$0xff]
    %v53 = vld [vmem:[%s13 + $0x8] sm:$0xff]
    %v54 = vld [vmem:[%s4] sm:$0xff]
    %v55 = vld [vmem:[%s4 + $0x8] sm:$0xff]
    %v58 = vcombine.high %v50, %v50
    %v59 = vcombine.high %v51, %v51
    %vm60 = vcmask 31744
    %v62 = vsel %vm60, %v54, 0
    %v65 = vsel %vm60, %v55, 0
    %vm67 = vcmask 1043456
    %v68 = vsel %vm67, %v50, 0
    %v70 = vsel %vm67, %v58, 0
    %v72 = vsel %vm67, %v51, 0
    %v74 = vsel %vm67, %v59, 0
    %76 = vmatprep.subr.mxu0 0.0
    %77 = vmatpush1.msra.mxu0 0.0
    %78 = vmatprep.subr.mxu0 0.0
    %79 = vmatpush1.msra.mxu0 0.0
    %80 = vmatprep.subr.mxu0 0.0
    %81 = vmatpush1.msra.mxu0 0.0
    %82 = vmatprep.subr.mxu0 0.0
    %83 = vmatpush1.msra.mxu0 0.0
    %84 = vmatprep.subr.mxu0 0.0
    %85 = vmatpush1.msra.mxu0 0.0
    %86 = vmatprep.subr.mxu0 0.0
    %87 = vmatpush1.msra.mxu0 0.0
    %88 = vmatprep.subr.mxu0 0.0
    %89 = vmatpush1.msra.mxu0 0.0
    %90 = vmatprep.subr.mxu0 0.0
    %91 = vmatpush1.msra.mxu0 0.0
    %92 = vmatprep.subr.mxu0 0.0
    %93 = vmatpush1.msra.mxu0 0.0
    %94 = vmatprep.subr.mxu0 0.0
    %95 = vmatpush1.msra.mxu0 0.0
    %96 = vmatprep.subr.mxu0 0.0
    %97 = vmatpush1.msra.mxu0 0.0
    %98 = vmatprep.subr.mxu0 0.0
    %99 = vmatpush1.msra.mxu0 0.0
    %100 = vmatprep.subr.mxu0 0.0
    %101 = vmatpush1.msra.mxu0 0.0
    %102 = vmatprep.subr.mxu0 0.0
    %103 = vmatpush1.msra.mxu0 0.0
    %104 = vmatprep.subr.mxu0 0.0
    %105 = vmatpush1.msra.mxu0 0.0
    %106 = vmatprep.subr.mxu0 %v70
    %107 = vmatpush1.msra.mxu0 %v68
    %108 = vmatprep.subr.mxu0 0.0
    %109 = vmatpush2.msra.mxu0 0.0
    %110 = vmatprep.subr.mxu0 0.0
    %111 = vmatpush2.msra.mxu0 0.0
    %112 = vmatprep.subr.mxu0 0.0
    %113 = vmatpush2.msra.mxu0 0.0
    %114 = vmatprep.subr.mxu0 0.0
    %115 = vmatpush2.msra.mxu0 0.0
    %116 = vmatprep.subr.mxu0 0.0
    %117 = vmatpush2.msra.mxu0 0.0
    %118 = vmatprep.subr.mxu0 0.0
    %119 = vmatpush2.msra.mxu0 0.0
    %120 = vmatprep.subr.mxu0 0.0
    %121 = vmatpush2.msra.mxu0 0.0
    %122 = vmatprep.subr.mxu0 0.0
    %123 = vmatpush2.msra.mxu0 0.0
    %124 = vmatprep.subr.mxu0 0.0
    %125 = vmatpush2.msra.mxu0 0.0
    %126 = vmatprep.subr.mxu0 0.0
    %127 = vmatpush2.msra.mxu0 0.0
    %128 = vmatprep.subr.mxu0 0.0
    %129 = vmatpush2.msra.mxu0 0.0
    %130 = vmatprep.subr.mxu0 0.0
    %131 = vmatpush2.msra.mxu0 0.0
    %132 = vmatprep.subr.mxu0 0.0
    %133 = vmatpush2.msra.mxu0 0.0
    %134 = vmatprep.subr.mxu0 0.0
    %135 = vmatpush2.msra.mxu0 0.0
    %136 = vmatprep.subr.mxu0 0.0
    %137 = vmatpush2.msra.mxu0 0.0
    %138 = vmatprep.subr.mxu0 0.0
    %139 = vmatpush2.msra.mxu0 0.0
    %140 = vmatprep.mubr.f32.mxu0 0.0
    %141 = vmatmul.mubr.f32.gmra.mxu0 %v62
    %v142 = vpop.f32.mrf.mxu0
    %v143 = vadd.f32 0.0, %v142
    %v144 = vpop.f32.mrf.mxu0
    %v145 = vadd.f32 0.0, %v144
    %146 = vmatprep.mubr.f32.mxu0 0.0
    %147 = vmatmul.mubr.f32.gmra.mxu0 %v65
    %v148 = vpop.f32.mrf.mxu0
    %v149 = vadd.f32 0.0, %v148
    %v150 = vpop.f32.mrf.mxu0
    %v151 = vadd.f32 0.0, %v150
    %152 = vdwg.mxu0
    %153 = vmatprep.subr.mxu0 0.0
    %154 = vmatpush1.msra.mxu0 0.0
    %155 = vmatprep.subr.mxu0 0.0
    %156 = vmatpush1.msra.mxu0 0.0
    %157 = vmatprep.subr.mxu0 0.0
    %158 = vmatpush1.msra.mxu0 0.0
    %159 = vmatprep.subr.mxu0 0.0
    %160 = vmatpush1.msra.mxu0 0.0
    %161 = vmatprep.subr.mxu0 0.0
    %162 = vmatpush1.msra.mxu0 0.0
    %163 = vmatprep.subr.mxu0 0.0
    %164 = vmatpush1.msra.mxu0 0.0
    %165 = vmatprep.subr.mxu0 0.0
    %166 = vmatpush1.msra.mxu0 0.0
    %167 = vmatprep.subr.mxu0 0.0
    %168 = vmatpush1.msra.mxu0 0.0
    %169 = vmatprep.subr.mxu0 0.0
    %170 = vmatpush1.msra.mxu0 0.0
    %171 = vmatprep.subr.mxu0 0.0
    %172 = vmatpush1.msra.mxu0 0.0
    %173 = vmatprep.subr.mxu0 0.0
    %174 = vmatpush1.msra.mxu0 0.0
    %175 = vmatprep.subr.mxu0 0.0
    %176 = vmatpush1.msra.mxu0 0.0
    %177 = vmatprep.subr.mxu0 0.0
    %178 = vmatpush1.msra.mxu0 0.0
    %179 = vmatprep.subr.mxu0 0.0
    %180 = vmatpush1.msra.mxu0 0.0
    %181 = vmatprep.subr.mxu0 0.0
    %182 = vmatpush1.msra.mxu0 0.0
    %183 = vmatprep.subr.mxu0 %v74
    %184 = vmatpush1.msra.mxu0 %v72
    %185 = vmatprep.subr.mxu0 0.0
    %186 = vmatpush2.msra.mxu0 0.0
    %187 = vmatprep.subr.mxu0 0.0
    %188 = vmatpush2.msra.mxu0 0.0
    %189 = vmatprep.subr.mxu0 0.0
    %190 = vmatpush2.msra.mxu0 0.0
    %191 = vmatprep.subr.mxu0 0.0
    %192 = vmatpush2.msra.mxu0 0.0
    %193 = vmatprep.subr.mxu0 0.0
    %194 = vmatpush2.msra.mxu0 0.0
    %195 = vmatprep.subr.mxu0 0.0
    %196 = vmatpush2.msra.mxu0 0.0
    %197 = vmatprep.subr.mxu0 0.0
    %198 = vmatpush2.msra.mxu0 0.0
    %199 = vmatprep.subr.mxu0 0.0
    %200 = vmatpush2.msra.mxu0 0.0
    %201 = vmatprep.subr.mxu0 0.0
    %202 = vmatpush2.msra.mxu0 0.0
    %203 = vmatprep.subr.mxu0 0.0
    %204 = vmatpush2.msra.mxu0 0.0
    %205 = vmatprep.subr.mxu0 0.0
    %206 = vmatpush2.msra.mxu0 0.0
    %207 = vmatprep.subr.mxu0 0.0
    %208 = vmatpush2.msra.mxu0 0.0
    %209 = vmatprep.subr.mxu0 0.0
    %210 = vmatpush2.msra.mxu0 0.0
    %211 = vmatprep.subr.mxu0 0.0
    %212 = vmatpush2.msra.mxu0 0.0
    %213 = vmatprep.subr.mxu0 0.0
    %214 = vmatpush2.msra.mxu0 0.0
    %215 = vmatprep.subr.mxu0 0.0
    %216 = vmatpush2.msra.mxu0 0.0
    %217 = vmatprep.mubr.f32.mxu0 0.0
    %218 = vmatmul.mubr.f32.gmra.mxu0 %v62
    %v219 = vpop.f32.mrf.mxu0
    %v220 = vadd.f32 0.0, %v219
    %v221 = vpop.f32.mrf.mxu0
    %v222 = vadd.f32 0.0, %v221
    %223 = vmatprep.mubr.f32.mxu0 0.0
    %224 = vmatmul.mubr.f32.gmra.mxu0 %v65
    %v225 = vpop.f32.mrf.mxu0
    %v226 = vadd.f32 0.0, %v225
    %v227 = vpop.f32.mrf.mxu0
    %v228 = vadd.f32 0.0, %v227
    %229 = vdwg.mxu0
    %v230 = vld [vmem:[%s11] sm:$0xff]
    %v231 = vld [vmem:[%s11 + $0x8] sm:$0xff]
    %v232 = vld [vmem:[%s12] sm:$0xff]
    %v233 = vld [vmem:[%s12 + $0x8] sm:$0xff]
    %v234 = vadd.f32 %v143, %v145
    %v235 = vadd.f32 %v234, %v220
    %v236 = vadd.f32 %v235, %v222
    %237 = vadd.xlane.f32.xlu0 %v236
    %v238 = vpop.xlane.xlu0 %237
    %v239 = vadd.f32 %v149, %v151
    %v240 = vadd.f32 %v239, %v226
    %v241 = vadd.f32 %v240, %v228
    %242 = vadd.xlane.f32.xlu0 %v241
    %v243 = vpop.xlane.xlu0 %242
    %v244 = vrcp.pop 648.0
    %v245 = vmul.f32 %v238, %v244
    %v246 = vmul.f32 %v243, %v244
    %v247 = vsub.f32 %v143, %v245
    %v248 = vsub.f32 %v145, %v245
    %v249 = vsub.f32 %v220, %v245
    %v250 = vsub.f32 %v222, %v245
    %v251 = vsub.f32 %v149, %v246
    %v252 = vsub.f32 %v151, %v246
    %v253 = vsub.f32 %v226, %v246
    %v254 = vsub.f32 %v228, %v246
    %v255 = vmul.f32 %v247, %v247
    %v256 = vmul.f32 %v248, %v248
    %v257 = vmul.f32 %v249, %v249
    %v258 = vmul.f32 %v250, %v250
    %v259 = vmul.f32 %v251, %v251
    %v260 = vmul.f32 %v252, %v252
    %v261 = vmul.f32 %v253, %v253
    %v262 = vmul.f32 %v254, %v254
    %v263 = vadd.f32 %v255, %v256
    %v264 = vadd.f32 %v263, %v257
    %v265 = vadd.f32 %v264, %v258
    %266 = vadd.xlane.f32.xlu0 %v265
    %v267 = vpop.xlane.xlu0 %266
    %v268 = vadd.f32 %v259, %v260
    %v269 = vadd.f32 %v268, %v261
    %v270 = vadd.f32 %v269, %v262
    %271 = vadd.xlane.f32.xlu0 %v270
    %v272 = vpop.xlane.xlu0 %271
    %v273 = vmul.f32 %v245, 136.0
    %v274 = vmul.f32 %v246, 136.0
    %v275 = vmul.f32 %v273, %v245
    %v276 = vmul.f32 %v274, %v246
    %v277 = vadd.f32 %v267, %v275
    %v278 = vadd.f32 %v272, %v276
    %v279 = vmul.f32 %v277, %v244
    %v280 = vmul.f32 %v278, %v244
    %v281 = vadd.f32 %v279, 1e-05
    %v282 = vadd.f32 %v280, 1e-05
    %v283 = vrsqrt.pop %v281
    %v284 = vrsqrt.pop %v282
    %v285 = vmul.f32 %v230, %v283
    %v286 = vmul.f32 %v231, %v284
    %v287 = vmul.f32 %v245, %v285
    %v288 = vmul.f32 %v246, %v286
    %v289 = vsub.f32 %v232, %v287
    %v290 = vsub.f32 %v233, %v288
    %292 = vset.pattern.permute.xlu0 0
    %293 = vperm.xlu0 %292, %v285
    %v294 = vpop.permute.xlu0 %293
    %297 = vset.pattern.permute.xlu0 0
    %298 = vperm.xlu0 %297, %v286
    %v299 = vpop.permute.xlu0 %298
    %v301 = vmul.f32 %v143, %v294
    %v302 = vmul.f32 %v145, %v294
    %v303 = vmul.f32 %v220, %v294
    %v304 = vmul.f32 %v222, %v294
    %v305 = vmul.f32 %v149, %v299
    %v306 = vmul.f32 %v151, %v299
    %v307 = vmul.f32 %v226, %v299
    %v308 = vmul.f32 %v228, %v299
    %310 = vset.pattern.permute.xlu0 0
    %311 = vperm.xlu0 %310, %v289
    %v312 = vpop.permute.xlu0 %311
    %315 = vset.pattern.permute.xlu0 0
    %316 = vperm.xlu0 %315, %v290
    %v317 = vpop.permute.xlu0 %316
    %v319 = vadd.f32 %v301, %v312
    %v320 = vadd.f32 %v302, %v312
    %v321 = vadd.f32 %v303, %v312
    %v322 = vadd.f32 %v304, %v312
    %v323 = vadd.f32 %v305, %v317
    %v324 = vadd.f32 %v306, %v317
    %v325 = vadd.f32 %v307, %v317
    %v326 = vadd.f32 %v308, %v317
    %v327 = vld [vmem:[%s1] sm:$0xf]
    %v329 = vsel %vm60, %v327, 0
    %331 = vmatprep.subr.mxu0 0.0
    %332 = vmatpush1.msra.mxu0 0.0
    %333 = vmatprep.subr.mxu0 0.0
    %334 = vmatpush1.msra.mxu0 0.0
    %335 = vmatprep.subr.mxu0 0.0
    %336 = vmatpush1.msra.mxu0 0.0
    %337 = vmatprep.subr.mxu0 0.0
    %338 = vmatpush1.msra.mxu0 0.0
    %339 = vmatprep.subr.mxu0 0.0
    %340 = vmatpush1.msra.mxu0 0.0
    %341 = vmatprep.subr.mxu0 0.0
    %342 = vmatpush1.msra.mxu0 0.0
    %343 = vmatprep.subr.mxu0 0.0
    %344 = vmatpush1.msra.mxu0 0.0
    %345 = vmatprep.subr.mxu0 0.0
    %346 = vmatpush1.msra.mxu0 0.0
    %347 = vmatprep.subr.mxu0 0.0
    %348 = vmatpush1.msra.mxu0 0.0
    %349 = vmatprep.subr.mxu0 0.0
    %350 = vmatpush1.msra.mxu0 0.0
    %351 = vmatprep.subr.mxu0 0.0
    %352 = vmatpush1.msra.mxu0 0.0
    %353 = vmatprep.subr.mxu0 0.0
    %354 = vmatpush1.msra.mxu0 0.0
    %355 = vmatprep.subr.mxu0 0.0
    %356 = vmatpush1.msra.mxu0 0.0
    %357 = vmatprep.subr.mxu0 0.0
    %358 = vmatpush1.msra.mxu0 0.0
    %359 = vmatprep.subr.mxu0 0.0
    %360 = vmatpush1.msra.mxu0 0.0
    %361 = vmatprep.subr.mxu0 %v70
    %362 = vmatpush1.msra.mxu0 %v68
    %363 = vmatprep.subr.mxu0 0.0
    %364 = vmatpush2.msra.mxu0 0.0
    %365 = vmatprep.subr.mxu0 0.0
    %366 = vmatpush2.msra.mxu0 0.0
    %367 = vmatprep.subr.mxu0 0.0
    %368 = vmatpush2.msra.mxu0 0.0
    %369 = vmatprep.subr.mxu0 0.0
    %370 = vmatpush2.msra.mxu0 0.0
    %371 = vmatprep.subr.mxu0 0.0
    %372 = vmatpush2.msra.mxu0 0.0
    %373 = vmatprep.subr.mxu0 0.0
    %374 = vmatpush2.msra.mxu0 0.0
    %375 = vmatprep.subr.mxu0 0.0
    %376 = vmatpush2.msra.mxu0 0.0
    %377 = vmatprep.subr.mxu0 0.0
    %378 = vmatpush2.msra.mxu0 0.0
    %379 = vmatprep.subr.mxu0 0.0
    %380 = vmatpush2.msra.mxu0 0.0
    %381 = vmatprep.subr.mxu0 0.0
    %382 = vmatpush2.msra.mxu0 0.0
    %383 = vmatprep.subr.mxu0 0.0
    %384 = vmatpush2.msra.mxu0 0.0
    %385 = vmatprep.subr.mxu0 0.0
    %386 = vmatpush2.msra.mxu0 0.0
    %387 = vmatprep.subr.mxu0 0.0
    %388 = vmatpush2.msra.mxu0 0.0
    %389 = vmatprep.subr.mxu0 0.0
    %390 = vmatpush2.msra.mxu0 0.0
    %391 = vmatprep.subr.mxu0 0.0
    %392 = vmatpush2.msra.mxu0 0.0
    %393 = vmatprep.subr.mxu0 0.0
    %394 = vmatpush2.msra.mxu0 0.0
    %395 = vmatprep.mubr.f32.mxu0 0.0
    %396 = vmatmul.mubr.f32.gmra.mxu0 %v329
    %v397 = vpop.f32.mrf.mxu0
    %v398 = vadd.f32 0.0, %v397
    %v399 = vpop.f32.mrf.mxu0
    %v400 = vadd.f32 0.0, %v399
    %401 = vdwg.mxu0
    %402 = vmatprep.subr.mxu0 0.0
    %403 = vmatpush1.msra.mxu0 0.0
    %404 = vmatprep.subr.mxu0 0.0
    %405 = vmatpush1.msra.mxu0 0.0
    %406 = vmatprep.subr.mxu0 0.0
    %407 = vmatpush1.msra.mxu0 0.0
    %408 = vmatprep.subr.mxu0 0.0
    %409 = vmatpush1.msra.mxu0 0.0
    %410 = vmatprep.subr.mxu0 0.0
    %411 = vmatpush1.msra.mxu0 0.0
    %412 = vmatprep.subr.mxu0 0.0
    %413 = vmatpush1.msra.mxu0 0.0
    %414 = vmatprep.subr.mxu0 0.0
    %415 = vmatpush1.msra.mxu0 0.0
    %416 = vmatprep.subr.mxu0 0.0
    %417 = vmatpush1.msra.mxu0 0.0
    %418 = vmatprep.subr.mxu0 0.0
    %419 = vmatpush1.msra.mxu0 0.0
    %420 = vmatprep.subr.mxu0 0.0
    %421 = vmatpush1.msra.mxu0 0.0
    %422 = vmatprep.subr.mxu0 0.0
    %423 = vmatpush1.msra.mxu0 0.0
    %424 = vmatprep.subr.mxu0 0.0
    %425 = vmatpush1.msra.mxu0 0.0
    %426 = vmatprep.subr.mxu0 0.0
    %427 = vmatpush1.msra.mxu0 0.0
    %428 = vmatprep.subr.mxu0 0.0
    %429 = vmatpush1.msra.mxu0 0.0
    %430 = vmatprep.subr.mxu0 0.0
    %431 = vmatpush1.msra.mxu0 0.0
    %432 = vmatprep.subr.mxu0 %v74
    %433 = vmatpush1.msra.mxu0 %v72
    %434 = vmatprep.subr.mxu0 0.0
    %435 = vmatpush2.msra.mxu0 0.0
    %436 = vmatprep.subr.mxu0 0.0
    %437 = vmatpush2.msra.mxu0 0.0
    %438 = vmatprep.subr.mxu0 0.0
    %439 = vmatpush2.msra.mxu0 0.0
    %440 = vmatprep.subr.mxu0 0.0
    %441 = vmatpush2.msra.mxu0 0.0
    %442 = vmatprep.subr.mxu0 0.0
    %443 = vmatpush2.msra.mxu0 0.0
    %444 = vmatprep.subr.mxu0 0.0
    %445 = vmatpush2.msra.mxu0 0.0
    %446 = vmatprep.subr.mxu0 0.0
    %447 = vmatpush2.msra.mxu0 0.0
    %448 = vmatprep.subr.mxu0 0.0
    %449 = vmatpush2.msra.mxu0 0.0
    %450 = vmatprep.subr.mxu0 0.0
    %451 = vmatpush2.msra.mxu0 0.0
    %452 = vmatprep.subr.mxu0 0.0
    %453 = vmatpush2.msra.mxu0 0.0
    %454 = vmatprep.subr.mxu0 0.0
    %455 = vmatpush2.msra.mxu0 0.0
    %456 = vmatprep.subr.mxu0 0.0
    %457 = vmatpush2.msra.mxu0 0.0
    %458 = vmatprep.subr.mxu0 0.0
    %459 = vmatpush2.msra.mxu0 0.0
    %460 = vmatprep.subr.mxu0 0.0
    %461 = vmatpush2.msra.mxu0 0.0
    %462 = vmatprep.subr.mxu0 0.0
    %463 = vmatpush2.msra.mxu0 0.0
    %464 = vmatprep.subr.mxu0 0.0
    %465 = vmatpush2.msra.mxu0 0.0
    %466 = vmatprep.mubr.f32.mxu0 0.0
    %467 = vmatmul.mubr.f32.gmra.mxu0 %v329
    %v468 = vpop.f32.mrf.mxu0
    %v469 = vadd.f32 0.0, %v468
    %v470 = vpop.f32.mrf.mxu0
    %v471 = vadd.f32 0.0, %v470
    %472 = vdwg.mxu0
    %v473 = vld [vmem:[%s5] sm:$0xf]
    %v474 = vld [vmem:[%s6] sm:$0xf]
    %v475 = vsel %vm67, %v398, 0.0
    %v476 = vsel %vm67, %v400, 0.0
    %v477 = vadd.f32 %v475, %v476
    %v478 = vsel %vm67, %v469, 0.0
    %v479 = vadd.f32 %v477, %v478
    %v480 = vsel %vm67, %v471, 0.0
    %v481 = vadd.f32 %v479, %v480
    %482 = vadd.xlane.f32.xlu0 %v481
    %v483 = vpop.xlane.xlu0 %482
    %v484 = vrcp.pop 512.0
    %v485 = vmul.f32 %v483, %v484
    %v486 = vsub.f32 %v398, %v485
    %v487 = vsub.f32 %v400, %v485
    %v488 = vsub.f32 %v469, %v485
    %v489 = vsub.f32 %v471, %v485
    %v490 = vmul.f32 %v486, %v486
    %v491 = vmul.f32 %v487, %v487
    %v492 = vmul.f32 %v488, %v488
    %v493 = vmul.f32 %v489, %v489
    %v494 = vsel %vm67, %v490, 0.0
    %v495 = vsel %vm67, %v491, 0.0
    %v496 = vadd.f32 %v494, %v495
    %v497 = vsel %vm67, %v492, 0.0
    %v498 = vadd.f32 %v496, %v497
    %v499 = vsel %vm67, %v493, 0.0
    %v500 = vadd.f32 %v498, %v499
    %501 = vadd.xlane.f32.xlu0 %v500
    %v502 = vpop.xlane.xlu0 %501
    %v503 = vmul.f32 %v485, 0.0
    %v504 = vmul.f32 %v503, %v485
    %v505 = vadd.f32 %v502, %v504
    %v506 = vmul.f32 %v505, %v484
    %v507 = vadd.f32 %v506, 1e-05
    %v508 = vrsqrt.pop %v507
    %v509 = vmul.f32 %v473, %v508
    %v510 = vmul.f32 %v485, %v509
    %v511 = vsub.f32 %v474, %v510
    %513 = vset.pattern.permute.xlu0 0
    %514 = vperm.xlu0 %513, %v509
    %v515 = vpop.permute.xlu0 %514
    %v517 = vmul.f32 %v398, %v515
    %v518 = vmul.f32 %v400, %v515
    %v519 = vmul.f32 %v469, %v515
    %v520 = vmul.f32 %v471, %v515
    %522 = vset.pattern.permute.xlu0 0
    %523 = vperm.xlu0 %522, %v511
    %v524 = vpop.permute.xlu0 %523
    %v526 = vadd.f32 %v517, %v524
    %v527 = vadd.f32 %v518, %v524
    %v528 = vadd.f32 %v519, %v524
    %v529 = vadd.f32 %v520, %v524
    %v530 = vmax.f32 %v526, 0.0
    %v531 = vmax.f32 %v527, 0.0
    %v532 = vmax.f32 %v528, 0.0
    %v533 = vmax.f32 %v529, 0.0
    %535 = vrot.lane.b32.xlu0 %v533, 17
    %v536 = vpop.permute.xlu0 %535
    %541 = vrot.lane.b32.xlu0 %v530, 17
    %v542 = vpop.permute.xlu0 %541
    %543 = vrot.lane.b32.xlu0 %v531, 17
    %v544 = vpop.permute.xlu0 %543
    %545 = vrot.lane.b32.xlu0 %v532, 17
    %v546 = vpop.permute.xlu0 %545
    %vm547 = vcmask 138240
    %v548 = vsel %vm547, %v542, %v544
    %v549 = vsel %vm547, %v544, %v546
    %v550 = vsel %vm547, %v546, %v536
    %v555 = vsel %vm547, %v536, %v542
    %v558 = vlaneseq
    %v559 = vshrl.u32 %v558, 7
    %v560 = vsub.s32 0, %v559
    %v561 = vrot.slane %v52, %v560
    %v562 = vlaneseq
    %v563 = vshrl.u32 %v562, 7
    %v564 = vsub.s32 4, %v563
    %v565 = vrot.slane %v52, %v564
    %v566 = vlaneseq
    %v567 = vshrl.u32 %v566, 7
    %v568 = vsub.s32 0, %v567
    %v569 = vrot.slane %v53, %v568
    %v570 = vlaneseq
    %v571 = vshrl.u32 %v570, 7
    %v572 = vsub.s32 4, %v571
    %v573 = vrot.slane %v53, %v572
    %v578 = vlaneseq
    %v579 = vshrl.u32 %v578, 7
    %v580 = vsub.s32 0, %v579
    %v581 = vrot.slane %v561, %v580
    %v582 = vlaneseq
    %v583 = vshrl.u32 %v582, 7
    %v584 = vsub.s32 0, %v583
    %v585 = vrot.slane %v565, %v584
    %v586 = vlaneseq
    %v587 = vshrl.u32 %v586, 7
    %v588 = vsub.s32 0, %v587
    %v589 = vrot.slane %v569, %v588
    %v590 = vlaneseq
    %v591 = vshrl.u32 %v590, 7
    %v592 = vsub.s32 0, %v591
    %v593 = vrot.slane %v573, %v592
    %v594 = vmul.f32 %v555, %v581
    %v595 = vmul.f32 %v548, %v585
    %v596 = vmul.f32 %v549, %v589
    %v597 = vmul.f32 %v550, %v593
    %v598 = vlaneseq
    %v599 = vshrl.u32 %v598, 7
    %v600 = vsub.s32 2, %v599
    %v601 = vrot.slane %v52, %v600
    %v602 = vlaneseq
    %v603 = vshrl.u32 %v602, 7
    %v604 = vsub.s32 6, %v603
    %v605 = vrot.slane %v52, %v604
    %v606 = vlaneseq
    %v607 = vshrl.u32 %v606, 7
    %v608 = vsub.s32 2, %v607
    %v609 = vrot.slane %v53, %v608
    %v610 = vlaneseq
    %v611 = vshrl.u32 %v610, 7
    %v612 = vsub.s32 6, %v611
    %v613 = vrot.slane %v53, %v612
    %v618 = vlaneseq
    %v619 = vshrl.u32 %v618, 7
    %v620 = vsub.s32 2, %v619
    %v621 = vrot.slane %v601, %v620
    %v622 = vlaneseq
    %v623 = vshrl.u32 %v622, 7
    %v624 = vsub.s32 2, %v623
    %v625 = vrot.slane %v605, %v624
    %v626 = vlaneseq
    %v627 = vshrl.u32 %v626, 7
    %v628 = vsub.s32 2, %v627
    %v629 = vrot.slane %v609, %v628
    %v630 = vlaneseq
    %v631 = vshrl.u32 %v630, 7
    %v632 = vsub.s32 2, %v631
    %v633 = vrot.slane %v613, %v632
    %v634 = vmul.f32 %v594, %v621
    %v635 = vmul.f32 %v595, %v625
    %v636 = vmul.f32 %v596, %v629
    %v637 = vmul.f32 %v597, %v633
    %v638 = vld [vmem:[%s2] sm:$0xf]
    %639 = vrot.lane.b32.xlu0 %v533, 16
    %v640 = vpop.permute.xlu0 %639
    %642 = vrot.lane.b32.xlu0 %v530, 16
    %v643 = vpop.permute.xlu0 %642
    %644 = vrot.lane.b32.xlu0 %v531, 16
    %v645 = vpop.permute.xlu0 %644
    %646 = vrot.lane.b32.xlu0 %v532, 16
    %v647 = vpop.permute.xlu0 %646
    %vm648 = vcmask 130048
    %v649 = vsel %vm648, %v643, %v645
    %v650 = vsel %vm648, %v645, %v647
    %v651 = vsel %vm648, %v647, %v640
    %v656 = vsel %vm648, %v640, %v643
    %v657 = vmul.f32 %v656, %v581
    %v658 = vmul.f32 %v649, %v585
    %v659 = vmul.f32 %v650, %v589
    %v660 = vmul.f32 %v651, %v593
    %s661 = scalar_lea.vmem %s2, 4
    %v662 = vld [vmem:[%s661] sm:$0xf]
    %v664 = vsel %vm60, %v662, 0
    %v667 = vsel %vm67, %v657, 0
    %v670 = vsel %vm67, %v658, 0
    %v673 = vsel %vm67, %v659, 0
    %v676 = vsel %vm67, %v660, 0
    %678 = vmatprep.subr.mxu0 0.0
    %679 = vmatpush1.msra.mxu0 0.0
    %680 = vmatprep.subr.mxu0 0.0
    %681 = vmatpush1.msra.mxu0 0.0
    %682 = vmatprep.subr.mxu0 0.0
    %683 = vmatpush1.msra.mxu0 0.0
    %684 = vmatprep.subr.mxu0 0.0
    %685 = vmatpush1.msra.mxu0 0.0
    %686 = vmatprep.subr.mxu0 0.0
    %687 = vmatpush1.msra.mxu0 0.0
    %688 = vmatprep.subr.mxu0 0.0
    %689 = vmatpush1.msra.mxu0 0.0
    %690 = vmatprep.subr.mxu0 0.0
    %691 = vmatpush1.msra.mxu0 0.0
    %692 = vmatprep.subr.mxu0 0.0
    %693 = vmatpush1.msra.mxu0 0.0
    %694 = vmatprep.subr.mxu0 0.0
    %695 = vmatpush1.msra.mxu0 0.0
    %696 = vmatprep.subr.mxu0 0.0
    %697 = vmatpush1.msra.mxu0 0.0
    %698 = vmatprep.subr.mxu0 0.0
    %699 = vmatpush1.msra.mxu0 0.0
    %700 = vmatprep.subr.mxu0 0.0
    %701 = vmatpush1.msra.mxu0 0.0
    %702 = vmatprep.subr.mxu0 0.0
    %703 = vmatpush1.msra.mxu0 0.0
    %704 = vmatprep.subr.mxu0 0.0
    %705 = vmatpush1.msra.mxu0 0.0
    %706 = vmatprep.subr.mxu0 0.0
    %707 = vmatpush1.msra.mxu0 0.0
    %708 = vmatprep.subr.mxu0 %v670
    %709 = vmatpush1.msra.mxu0 %v667
    %710 = vmatprep.subr.mxu0 0.0
    %711 = vmatpush2.msra.mxu0 0.0
    %712 = vmatprep.subr.mxu0 0.0
    %713 = vmatpush2.msra.mxu0 0.0
    %714 = vmatprep.subr.mxu0 0.0
    %715 = vmatpush2.msra.mxu0 0.0
    %716 = vmatprep.subr.mxu0 0.0
    %717 = vmatpush2.msra.mxu0 0.0
    %718 = vmatprep.subr.mxu0 0.0
    %719 = vmatpush2.msra.mxu0 0.0
    %720 = vmatprep.subr.mxu0 0.0
    %721 = vmatpush2.msra.mxu0 0.0
    %722 = vmatprep.subr.mxu0 0.0
    %723 = vmatpush2.msra.mxu0 0.0
    %724 = vmatprep.subr.mxu0 0.0
    %725 = vmatpush2.msra.mxu0 0.0
    %726 = vmatprep.subr.mxu0 0.0
    %727 = vmatpush2.msra.mxu0 0.0
    %728 = vmatprep.subr.mxu0 0.0
    %729 = vmatpush2.msra.mxu0 0.0
    %730 = vmatprep.subr.mxu0 0.0
    %731 = vmatpush2.msra.mxu0 0.0
    %732 = vmatprep.subr.mxu0 0.0
    %733 = vmatpush2.msra.mxu0 0.0
    %734 = vmatprep.subr.mxu0 0.0
    %735 = vmatpush2.msra.mxu0 0.0
    %736 = vmatprep.subr.mxu0 0.0
    %737 = vmatpush2.msra.mxu0 0.0
    %738 = vmatprep.subr.mxu0 0.0
    %739 = vmatpush2.msra.mxu0 0.0
    %740 = vmatprep.subr.mxu0 0.0
    %741 = vmatpush2.msra.mxu0 0.0
    %742 = vmatprep.mubr.f32.mxu0 0.0
    %743 = vmatmul.mubr.f32.gmra.mxu0 %v664
    %v744 = vpop.f32.mrf.mxu0
    %v745 = vadd.f32 0.0, %v744
    %v746 = vpop.f32.mrf.mxu0
    %v747 = vadd.f32 0.0, %v746
    %748 = vdwg.mxu0
    %749 = vmatprep.subr.mxu0 0.0
    %750 = vmatpush1.msra.mxu0 0.0
    %751 = vmatprep.subr.mxu0 0.0
    %752 = vmatpush1.msra.mxu0 0.0
    %753 = vmatprep.subr.mxu0 0.0
    %754 = vmatpush1.msra.mxu0 0.0
    %755 = vmatprep.subr.mxu0 0.0
    %756 = vmatpush1.msra.mxu0 0.0
    %757 = vmatprep.subr.mxu0 0.0
    %758 = vmatpush1.msra.mxu0 0.0
    %759 = vmatprep.subr.mxu0 0.0
    %760 = vmatpush1.msra.mxu0 0.0
    %761 = vmatprep.subr.mxu0 0.0
    %762 = vmatpush1.msra.mxu0 0.0
    %763 = vmatprep.subr.mxu0 0.0
    %764 = vmatpush1.msra.mxu0 0.0
    %765 = vmatprep.subr.mxu0 0.0
    %766 = vmatpush1.msra.mxu0 0.0
    %767 = vmatprep.subr.mxu0 0.0
    %768 = vmatpush1.msra.mxu0 0.0
    %769 = vmatprep.subr.mxu0 0.0
    %770 = vmatpush1.msra.mxu0 0.0
    %771 = vmatprep.subr.mxu0 0.0
    %772 = vmatpush1.msra.mxu0 0.0
    %773 = vmatprep.subr.mxu0 0.0
    %774 = vmatpush1.msra.mxu0 0.0
    %775 = vmatprep.subr.mxu0 0.0
    %776 = vmatpush1.msra.mxu0 0.0
    %777 = vmatprep.subr.mxu0 0.0
    %778 = vmatpush1.msra.mxu0 0.0
    %779 = vmatprep.subr.mxu0 %v676
    %780 = vmatpush1.msra.mxu0 %v673
    %781 = vmatprep.subr.mxu0 0.0
    %782 = vmatpush2.msra.mxu0 0.0
    %783 = vmatprep.subr.mxu0 0.0
    %784 = vmatpush2.msra.mxu0 0.0
    %785 = vmatprep.subr.mxu0 0.0
    %786 = vmatpush2.msra.mxu0 0.0
    %787 = vmatprep.subr.mxu0 0.0
    %788 = vmatpush2.msra.mxu0 0.0
    %789 = vmatprep.subr.mxu0 0.0
    %790 = vmatpush2.msra.mxu0 0.0
    %791 = vmatprep.subr.mxu0 0.0
    %792 = vmatpush2.msra.mxu0 0.0
    %793 = vmatprep.subr.mxu0 0.0
    %794 = vmatpush2.msra.mxu0 0.0
    %795 = vmatprep.subr.mxu0 0.0
    %796 = vmatpush2.msra.mxu0 0.0
    %797 = vmatprep.subr.mxu0 0.0
    %798 = vmatpush2.msra.mxu0 0.0
    %799 = vmatprep.subr.mxu0 0.0
    %800 = vmatpush2.msra.mxu0 0.0
    %801 = vmatprep.subr.mxu0 0.0
    %802 = vmatpush2.msra.mxu0 0.0
    %803 = vmatprep.subr.mxu0 0.0
    %804 = vmatpush2.msra.mxu0 0.0
    %805 = vmatprep.subr.mxu0 0.0
    %806 = vmatpush2.msra.mxu0 0.0
    %807 = vmatprep.subr.mxu0 0.0
    %808 = vmatpush2.msra.mxu0 0.0
    %809 = vmatprep.subr.mxu0 0.0
    %810 = vmatpush2.msra.mxu0 0.0
    %811 = vmatprep.subr.mxu0 0.0
    %812 = vmatpush2.msra.mxu0 0.0
    %813 = vmatprep.mubr.f32.mxu0 0.0
    %814 = vmatmul.mubr.f32.gmra.mxu0 %v664
    %v815 = vpop.f32.mrf.mxu0
    %v816 = vadd.f32 0.0, %v815
    %v817 = vpop.f32.mrf.mxu0
    %v818 = vadd.f32 0.0, %v817
    %819 = vdwg.mxu0
    %v821 = vsel %vm60, %v638, 0
    %v824 = vsel %vm67, %v634, 0
    %v827 = vsel %vm67, %v635, 0
    %v830 = vsel %vm67, %v636, 0
    %v833 = vsel %vm67, %v637, 0
    %835 = vmatprep.subr.mxu0 0.0
    %836 = vmatpush1.msra.mxu0 0.0
    %837 = vmatprep.subr.mxu0 0.0
    %838 = vmatpush1.msra.mxu0 0.0
    %839 = vmatprep.subr.mxu0 0.0
    %840 = vmatpush1.msra.mxu0 0.0
    %841 = vmatprep.subr.mxu0 0.0
    %842 = vmatpush1.msra.mxu0 0.0
    %843 = vmatprep.subr.mxu0 0.0
    %844 = vmatpush1.msra.mxu0 0.0
    %845 = vmatprep.subr.mxu0 0.0
    %846 = vmatpush1.msra.mxu0 0.0
    %847 = vmatprep.subr.mxu0 0.0
    %848 = vmatpush1.msra.mxu0 0.0
    %849 = vmatprep.subr.mxu0 0.0
    %850 = vmatpush1.msra.mxu0 0.0
    %851 = vmatprep.subr.mxu0 0.0
    %852 = vmatpush1.msra.mxu0 0.0
    %853 = vmatprep.subr.mxu0 0.0
    %854 = vmatpush1.msra.mxu0 0.0
    %855 = vmatprep.subr.mxu0 0.0
    %856 = vmatpush1.msra.mxu0 0.0
    %857 = vmatprep.subr.mxu0 0.0
    %858 = vmatpush1.msra.mxu0 0.0
    %859 = vmatprep.subr.mxu0 0.0
    %860 = vmatpush1.msra.mxu0 0.0
    %861 = vmatprep.subr.mxu0 0.0
    %862 = vmatpush1.msra.mxu0 0.0
    %863 = vmatprep.subr.mxu0 0.0
    %864 = vmatpush1.msra.mxu0 0.0
    %865 = vmatprep.subr.mxu0 %v827
    %866 = vmatpush1.msra.mxu0 %v824
    %867 = vmatprep.subr.mxu0 0.0
    %868 = vmatpush2.msra.mxu0 0.0
    %869 = vmatprep.subr.mxu0 0.0
    %870 = vmatpush2.msra.mxu0 0.0
    %871 = vmatprep.subr.mxu0 0.0
    %872 = vmatpush2.msra.mxu0 0.0
    %873 = vmatprep.subr.mxu0 0.0
    %874 = vmatpush2.msra.mxu0 0.0
    %875 = vmatprep.subr.mxu0 0.0
    %876 = vmatpush2.msra.mxu0 0.0
    %877 = vmatprep.subr.mxu0 0.0
    %878 = vmatpush2.msra.mxu0 0.0
    %879 = vmatprep.subr.mxu0 0.0
    %880 = vmatpush2.msra.mxu0 0.0
    %881 = vmatprep.subr.mxu0 0.0
    %882 = vmatpush2.msra.mxu0 0.0
    %883 = vmatprep.subr.mxu0 0.0
    %884 = vmatpush2.msra.mxu0 0.0
    %885 = vmatprep.subr.mxu0 0.0
    %886 = vmatpush2.msra.mxu0 0.0
    %887 = vmatprep.subr.mxu0 0.0
    %888 = vmatpush2.msra.mxu0 0.0
    %889 = vmatprep.subr.mxu0 0.0
    %890 = vmatpush2.msra.mxu0 0.0
    %891 = vmatprep.subr.mxu0 0.0
    %892 = vmatpush2.msra.mxu0 0.0
    %893 = vmatprep.subr.mxu0 0.0
    %894 = vmatpush2.msra.mxu0 0.0
    %895 = vmatprep.subr.mxu0 0.0
    %896 = vmatpush2.msra.mxu0 0.0
    %897 = vmatprep.subr.mxu0 0.0
    %898 = vmatpush2.msra.mxu0 0.0
    %899 = vmatprep.mubr.f32.mxu0 0.0
    %900 = vmatmul.mubr.f32.gmra.mxu0 %v821
    %v901 = vpop.f32.mrf.mxu0
    %v902 = vadd.f32 %v745, %v901
    %v903 = vpop.f32.mrf.mxu0
    %v904 = vadd.f32 %v747, %v903
    %905 = vdwg.mxu0
    %906 = vmatprep.subr.mxu0 0.0
    %907 = vmatpush1.msra.mxu0 0.0
    %908 = vmatprep.subr.mxu0 0.0
    %909 = vmatpush1.msra.mxu0 0.0
    %910 = vmatprep.subr.mxu0 0.0
    %911 = vmatpush1.msra.mxu0 0.0
    %912 = vmatprep.subr.mxu0 0.0
    %913 = vmatpush1.msra.mxu0 0.0
    %914 = vmatprep.subr.mxu0 0.0
    %915 = vmatpush1.msra.mxu0 0.0
    %916 = vmatprep.subr.mxu0 0.0
    %917 = vmatpush1.msra.mxu0 0.0
    %918 = vmatprep.subr.mxu0 0.0
    %919 = vmatpush1.msra.mxu0 0.0
    %920 = vmatprep.subr.mxu0 0.0
    %921 = vmatpush1.msra.mxu0 0.0
    %922 = vmatprep.subr.mxu0 0.0
    %923 = vmatpush1.msra.mxu0 0.0
    %924 = vmatprep.subr.mxu0 0.0
    %925 = vmatpush1.msra.mxu0 0.0
    %926 = vmatprep.subr.mxu0 0.0
    %927 = vmatpush1.msra.mxu0 0.0
    %928 = vmatprep.subr.mxu0 0.0
    %929 = vmatpush1.msra.mxu0 0.0
    %930 = vmatprep.subr.mxu0 0.0
    %931 = vmatpush1.msra.mxu0 0.0
    %932 = vmatprep.subr.mxu0 0.0
    %933 = vmatpush1.msra.mxu0 0.0
    %934 = vmatprep.subr.mxu0 0.0
    %935 = vmatpush1.msra.mxu0 0.0
    %936 = vmatprep.subr.mxu0 %v833
    %937 = vmatpush1.msra.mxu0 %v830
    %938 = vmatprep.subr.mxu0 0.0
    %939 = vmatpush2.msra.mxu0 0.0
    %940 = vmatprep.subr.mxu0 0.0
    %941 = vmatpush2.msra.mxu0 0.0
    %942 = vmatprep.subr.mxu0 0.0
    %943 = vmatpush2.msra.mxu0 0.0
    %944 = vmatprep.subr.mxu0 0.0
    %945 = vmatpush2.msra.mxu0 0.0
    %946 = vmatprep.subr.mxu0 0.0
    %947 = vmatpush2.msra.mxu0 0.0
    %948 = vmatprep.subr.mxu0 0.0
    %949 = vmatpush2.msra.mxu0 0.0
    %950 = vmatprep.subr.mxu0 0.0
    %951 = vmatpush2.msra.mxu0 0.0
    %952 = vmatprep.subr.mxu0 0.0
    %953 = vmatpush2.msra.mxu0 0.0
    %954 = vmatprep.subr.mxu0 0.0
    %955 = vmatpush2.msra.mxu0 0.0
    %956 = vmatprep.subr.mxu0 0.0
    %957 = vmatpush2.msra.mxu0 0.0
    %958 = vmatprep.subr.mxu0 0.0
    %959 = vmatpush2.msra.mxu0 0.0
    %960 = vmatprep.subr.mxu0 0.0
    %961 = vmatpush2.msra.mxu0 0.0
    %962 = vmatprep.subr.mxu0 0.0
    %963 = vmatpush2.msra.mxu0 0.0
    %964 = vmatprep.subr.mxu0 0.0
    %965 = vmatpush2.msra.mxu0 0.0
    %966 = vmatprep.subr.mxu0 0.0
    %967 = vmatpush2.msra.mxu0 0.0
    %968 = vmatprep.subr.mxu0 0.0
    %969 = vmatpush2.msra.mxu0 0.0
    %970 = vmatprep.mubr.f32.mxu0 0.0
    %971 = vmatmul.mubr.f32.gmra.mxu0 %v821
    %v972 = vpop.f32.mrf.mxu0
    %v973 = vadd.f32 %v816, %v972
    %v974 = vpop.f32.mrf.mxu0
    %v975 = vadd.f32 %v818, %v974
    %976 = vdwg.mxu0
    %977 = vrot.lane.b32.xlu0 %v533, 15
    %v978 = vpop.permute.xlu0 %977
    %980 = vrot.lane.b32.xlu0 %v530, 15
    %v981 = vpop.permute.xlu0 %980
    %982 = vrot.lane.b32.xlu0 %v531, 15
    %v983 = vpop.permute.xlu0 %982
    %984 = vrot.lane.b32.xlu0 %v532, 15
    %v985 = vpop.permute.xlu0 %984
    %vm986 = vcmask 121856
    %v987 = vsel %vm986, %v981, %v983
    %v988 = vsel %vm986, %v983, %v985
    %v989 = vsel %vm986, %v985, %v978
    %v994 = vsel %vm986, %v978, %v981
    %v995 = vmul.f32 %v994, %v581
    %v996 = vmul.f32 %v987, %v585
    %v997 = vmul.f32 %v988, %v589
    %v998 = vmul.f32 %v989, %v593
    %v999 = vlaneseq
    %v1000 = vshrl.u32 %v999, 7
    %v1001 = vsub.s32 3, %v1000
    %v1002 = vrot.slane %v52, %v1001
    %v1003 = vlaneseq
    %v1004 = vshrl.u32 %v1003, 7
    %v1005 = vsub.s32 7, %v1004
    %v1006 = vrot.slane %v52, %v1005
    %v1007 = vlaneseq
    %v1008 = vshrl.u32 %v1007, 7
    %v1009 = vsub.s32 3, %v1008
    %v1010 = vrot.slane %v53, %v1009
    %v1011 = vlaneseq
    %v1012 = vshrl.u32 %v1011, 7
    %v1013 = vsub.s32 7, %v1012
    %v1014 = vrot.slane %v53, %v1013
    %v1019 = vlaneseq
    %v1020 = vshrl.u32 %v1019, 7
    %v1021 = vsub.s32 3, %v1020
    %v1022 = vrot.slane %v1002, %v1021
    %v1023 = vlaneseq
    %v1024 = vshrl.u32 %v1023, 7
    %v1025 = vsub.s32 3, %v1024
    %v1026 = vrot.slane %v1006, %v1025
    %v1027 = vlaneseq
    %v1028 = vshrl.u32 %v1027, 7
    %v1029 = vsub.s32 3, %v1028
    %v1030 = vrot.slane %v1010, %v1029
    %v1031 = vlaneseq
    %v1032 = vshrl.u32 %v1031, 7
    %v1033 = vsub.s32 3, %v1032
    %v1034 = vrot.slane %v1014, %v1033
    %v1035 = vmul.f32 %v995, %v1022
    %v1036 = vmul.f32 %v996, %v1026
    %v1037 = vmul.f32 %v997, %v1030
    %v1038 = vmul.f32 %v998, %v1034
    %s1039 = scalar_lea.vmem %s2, 8
    %v1040 = vld [vmem:[%s1039] sm:$0xf]
    %v1042 = vsel %vm60, %v1040, 0
    %v1045 = vsel %vm67, %v1035, 0
    %v1048 = vsel %vm67, %v1036, 0
    %v1051 = vsel %vm67, %v1037, 0
    %v1054 = vsel %vm67, %v1038, 0
    %1056 = vmatprep.subr.mxu0 0.0
    %1057 = vmatpush1.msra.mxu0 0.0
    %1058 = vmatprep.subr.mxu0 0.0
    %1059 = vmatpush1.msra.mxu0 0.0
    %1060 = vmatprep.subr.mxu0 0.0
    %1061 = vmatpush1.msra.mxu0 0.0
    %1062 = vmatprep.subr.mxu0 0.0
    %1063 = vmatpush1.msra.mxu0 0.0
    %1064 = vmatprep.subr.mxu0 0.0
    %1065 = vmatpush1.msra.mxu0 0.0
    %1066 = vmatprep.subr.mxu0 0.0
    %1067 = vmatpush1.msra.mxu0 0.0
    %1068 = vmatprep.subr.mxu0 0.0
    %1069 = vmatpush1.msra.mxu0 0.0
    %1070 = vmatprep.subr.mxu0 0.0
    %1071 = vmatpush1.msra.mxu0 0.0
    %1072 = vmatprep.subr.mxu0 0.0
    %1073 = vmatpush1.msra.mxu0 0.0
    %1074 = vmatprep.subr.mxu0 0.0
    %1075 = vmatpush1.msra.mxu0 0.0
    %1076 = vmatprep.subr.mxu0 0.0
    %1077 = vmatpush1.msra.mxu0 0.0
    %1078 = vmatprep.subr.mxu0 0.0
    %1079 = vmatpush1.msra.mxu0 0.0
    %1080 = vmatprep.subr.mxu0 0.0
    %1081 = vmatpush1.msra.mxu0 0.0
    %1082 = vmatprep.subr.mxu0 0.0
    %1083 = vmatpush1.msra.mxu0 0.0
    %1084 = vmatprep.subr.mxu0 0.0
    %1085 = vmatpush1.msra.mxu0 0.0
    %1086 = vmatprep.subr.mxu0 %v1048
    %1087 = vmatpush1.msra.mxu0 %v1045
    %1088 = vmatprep.subr.mxu0 0.0
    %1089 = vmatpush2.msra.mxu0 0.0
    %1090 = vmatprep.subr.mxu0 0.0
    %1091 = vmatpush2.msra.mxu0 0.0
    %1092 = vmatprep.subr.mxu0 0.0
    %1093 = vmatpush2.msra.mxu0 0.0
    %1094 = vmatprep.subr.mxu0 0.0
    %1095 = vmatpush2.msra.mxu0 0.0
    %1096 = vmatprep.subr.mxu0 0.0
    %1097 = vmatpush2.msra.mxu0 0.0
    %1098 = vmatprep.subr.mxu0 0.0
    %1099 = vmatpush2.msra.mxu0 0.0
    %1100 = vmatprep.subr.mxu0 0.0
    %1101 = vmatpush2.msra.mxu0 0.0
    %1102 = vmatprep.subr.mxu0 0.0
    %1103 = vmatpush2.msra.mxu0 0.0
    %1104 = vmatprep.subr.mxu0 0.0
    %1105 = vmatpush2.msra.mxu0 0.0
    %1106 = vmatprep.subr.mxu0 0.0
    %1107 = vmatpush2.msra.mxu0 0.0
    %1108 = vmatprep.subr.mxu0 0.0
    %1109 = vmatpush2.msra.mxu0 0.0
    %1110 = vmatprep.subr.mxu0 0.0
    %1111 = vmatpush2.msra.mxu0 0.0
    %1112 = vmatprep.subr.mxu0 0.0
    %1113 = vmatpush2.msra.mxu0 0.0
    %1114 = vmatprep.subr.mxu0 0.0
    %1115 = vmatpush2.msra.mxu0 0.0
    %1116 = vmatprep.subr.mxu0 0.0
    %1117 = vmatpush2.msra.mxu0 0.0
    %1118 = vmatprep.subr.mxu0 0.0
    %1119 = vmatpush2.msra.mxu0 0.0
    %1120 = vmatprep.mubr.f32.mxu0 0.0
    %1121 = vmatmul.mubr.f32.gmra.mxu0 %v1042
    %v1122 = vpop.f32.mrf.mxu0
    %v1123 = vadd.f32 0.0, %v1122
    %v1124 = vpop.f32.mrf.mxu0
    %v1125 = vadd.f32 0.0, %v1124
    %1126 = vdwg.mxu0
    %1127 = vmatprep.subr.mxu0 0.0
    %1128 = vmatpush1.msra.mxu0 0.0
    %1129 = vmatprep.subr.mxu0 0.0
    %1130 = vmatpush1.msra.mxu0 0.0
    %1131 = vmatprep.subr.mxu0 0.0
    %1132 = vmatpush1.msra.mxu0 0.0
    %1133 = vmatprep.subr.mxu0 0.0
    %1134 = vmatpush1.msra.mxu0 0.0
    %1135 = vmatprep.subr.mxu0 0.0
    %1136 = vmatpush1.msra.mxu0 0.0
    %1137 = vmatprep.subr.mxu0 0.0
    %1138 = vmatpush1.msra.mxu0 0.0
    %1139 = vmatprep.subr.mxu0 0.0
    %1140 = vmatpush1.msra.mxu0 0.0
    %1141 = vmatprep.subr.mxu0 0.0
    %1142 = vmatpush1.msra.mxu0 0.0
    %1143 = vmatprep.subr.mxu0 0.0
    %1144 = vmatpush1.msra.mxu0 0.0
    %1145 = vmatprep.subr.mxu0 0.0
    %1146 = vmatpush1.msra.mxu0 0.0
    %1147 = vmatprep.subr.mxu0 0.0
    %1148 = vmatpush1.msra.mxu0 0.0
    %1149 = vmatprep.subr.mxu0 0.0
    %1150 = vmatpush1.msra.mxu0 0.0
    %1151 = vmatprep.subr.mxu0 0.0
    %1152 = vmatpush1.msra.mxu0 0.0
    %1153 = vmatprep.subr.mxu0 0.0
    %1154 = vmatpush1.msra.mxu0 0.0
    %1155 = vmatprep.subr.mxu0 0.0
    %1156 = vmatpush1.msra.mxu0 0.0
    %1157 = vmatprep.subr.mxu0 %v1054
    %1158 = vmatpush1.msra.mxu0 %v1051
    %1159 = vmatprep.subr.mxu0 0.0
    %1160 = vmatpush2.msra.mxu0 0.0
    %1161 = vmatprep.subr.mxu0 0.0
    %1162 = vmatpush2.msra.mxu0 0.0
    %1163 = vmatprep.subr.mxu0 0.0
    %1164 = vmatpush2.msra.mxu0 0.0
    %1165 = vmatprep.subr.mxu0 0.0
    %1166 = vmatpush2.msra.mxu0 0.0
    %1167 = vmatprep.subr.mxu0 0.0
    %1168 = vmatpush2.msra.mxu0 0.0
    %1169 = vmatprep.subr.mxu0 0.0
    %1170 = vmatpush2.msra.mxu0 0.0
    %1171 = vmatprep.subr.mxu0 0.0
    %1172 = vmatpush2.msra.mxu0 0.0
    %1173 = vmatprep.subr.mxu0 0.0
    %1174 = vmatpush2.msra.mxu0 0.0
    %1175 = vmatprep.subr.mxu0 0.0
    %1176 = vmatpush2.msra.mxu0 0.0
    %1177 = vmatprep.subr.mxu0 0.0
    %1178 = vmatpush2.msra.mxu0 0.0
    %1179 = vmatprep.subr.mxu0 0.0
    %1180 = vmatpush2.msra.mxu0 0.0
    %1181 = vmatprep.subr.mxu0 0.0
    %1182 = vmatpush2.msra.mxu0 0.0
    %1183 = vmatprep.subr.mxu0 0.0
    %1184 = vmatpush2.msra.mxu0 0.0
    %1185 = vmatprep.subr.mxu0 0.0
    %1186 = vmatpush2.msra.mxu0 0.0
    %1187 = vmatprep.subr.mxu0 0.0
    %1188 = vmatpush2.msra.mxu0 0.0
    %1189 = vmatprep.subr.mxu0 0.0
    %1190 = vmatpush2.msra.mxu0 0.0
    %1191 = vmatprep.mubr.f32.mxu0 0.0
    %1192 = vmatmul.mubr.f32.gmra.mxu0 %v1042
    %v1193 = vpop.f32.mrf.mxu0
    %v1194 = vadd.f32 0.0, %v1193
    %v1195 = vpop.f32.mrf.mxu0
    %v1196 = vadd.f32 0.0, %v1195
    %1197 = vdwg.mxu0
    %v1198 = vadd.f32 %v902, %v1123
    %v1199 = vadd.f32 %v904, %v1125
    %v1200 = vadd.f32 %v973, %v1194
    %v1201 = vadd.f32 %v975, %v1196
    %1202 = vrot.lane.b32.xlu0 %v533, 1
    %v1203 = vpop.permute.xlu0 %1202
    %1205 = vrot.lane.b32.xlu0 %v530, 1
    %v1206 = vpop.permute.xlu0 %1205
    %1207 = vrot.lane.b32.xlu0 %v531, 1
    %v1208 = vpop.permute.xlu0 %1207
    %1209 = vrot.lane.b32.xlu0 %v532, 1
    %v1210 = vpop.permute.xlu0 %1209
    %vm1211 = vcmask 7168
    %v1212 = vsel %vm1211, %v1206, %v1208
    %v1213 = vsel %vm1211, %v1208, %v1210
    %v1214 = vsel %vm1211, %v1210, %v1203
    %v1219 = vsel %vm1211, %v1203, %v1206
    %v1220 = vmul.f32 %v1219, %v621
    %v1221 = vmul.f32 %v1212, %v625
    %v1222 = vmul.f32 %v1213, %v629
    %v1223 = vmul.f32 %v1214, %v633
    %s1224 = scalar_lea.vmem %s2, 12
    %v1225 = vld [vmem:[%s1224] sm:$0xf]
    %v1227 = vsel %vm60, %v1225, 0
    %v1230 = vsel %vm67, %v1220, 0
    %v1233 = vsel %vm67, %v1221, 0
    %v1236 = vsel %vm67, %v1222, 0
    %v1239 = vsel %vm67, %v1223, 0
    %1241 = vmatprep.subr.mxu0 0.0
    %1242 = vmatpush1.msra.mxu0 0.0
    %1243 = vmatprep.subr.mxu0 0.0
    %1244 = vmatpush1.msra.mxu0 0.0
    %1245 = vmatprep.subr.mxu0 0.0
    %1246 = vmatpush1.msra.mxu0 0.0
    %1247 = vmatprep.subr.mxu0 0.0
    %1248 = vmatpush1.msra.mxu0 0.0
    %1249 = vmatprep.subr.mxu0 0.0
    %1250 = vmatpush1.msra.mxu0 0.0
    %1251 = vmatprep.subr.mxu0 0.0
    %1252 = vmatpush1.msra.mxu0 0.0
    %1253 = vmatprep.subr.mxu0 0.0
    %1254 = vmatpush1.msra.mxu0 0.0
    %1255 = vmatprep.subr.mxu0 0.0
    %1256 = vmatpush1.msra.mxu0 0.0
    %1257 = vmatprep.subr.mxu0 0.0
    %1258 = vmatpush1.msra.mxu0 0.0
    %1259 = vmatprep.subr.mxu0 0.0
    %1260 = vmatpush1.msra.mxu0 0.0
    %1261 = vmatprep.subr.mxu0 0.0
    %1262 = vmatpush1.msra.mxu0 0.0
    %1263 = vmatprep.subr.mxu0 0.0
    %1264 = vmatpush1.msra.mxu0 0.0
    %1265 = vmatprep.subr.mxu0 0.0
    %1266 = vmatpush1.msra.mxu0 0.0
    %1267 = vmatprep.subr.mxu0 0.0
    %1268 = vmatpush1.msra.mxu0 0.0
    %1269 = vmatprep.subr.mxu0 0.0
    %1270 = vmatpush1.msra.mxu0 0.0
    %1271 = vmatprep.subr.mxu0 %v1233
    %1272 = vmatpush1.msra.mxu0 %v1230
    %1273 = vmatprep.subr.mxu0 0.0
    %1274 = vmatpush2.msra.mxu0 0.0
    %1275 = vmatprep.subr.mxu0 0.0
    %1276 = vmatpush2.msra.mxu0 0.0
    %1277 = vmatprep.subr.mxu0 0.0
    %1278 = vmatpush2.msra.mxu0 0.0
    %1279 = vmatprep.subr.mxu0 0.0
    %1280 = vmatpush2.msra.mxu0 0.0
    %1281 = vmatprep.subr.mxu0 0.0
    %1282 = vmatpush2.msra.mxu0 0.0
    %1283 = vmatprep.subr.mxu0 0.0
    %1284 = vmatpush2.msra.mxu0 0.0
    %1285 = vmatprep.subr.mxu0 0.0
    %1286 = vmatpush2.msra.mxu0 0.0
    %1287 = vmatprep.subr.mxu0 0.0
    %1288 = vmatpush2.msra.mxu0 0.0
    %1289 = vmatprep.subr.mxu0 0.0
    %1290 = vmatpush2.msra.mxu0 0.0
    %1291 = vmatprep.subr.mxu0 0.0
    %1292 = vmatpush2.msra.mxu0 0.0
    %1293 = vmatprep.subr.mxu0 0.0
    %1294 = vmatpush2.msra.mxu0 0.0
    %1295 = vmatprep.subr.mxu0 0.0
    %1296 = vmatpush2.msra.mxu0 0.0
    %1297 = vmatprep.subr.mxu0 0.0
    %1298 = vmatpush2.msra.mxu0 0.0
    %1299 = vmatprep.subr.mxu0 0.0
    %1300 = vmatpush2.msra.mxu0 0.0
    %1301 = vmatprep.subr.mxu0 0.0
    %1302 = vmatpush2.msra.mxu0 0.0
    %1303 = vmatprep.subr.mxu0 0.0
    %1304 = vmatpush2.msra.mxu0 0.0
    %1305 = vmatprep.mubr.f32.mxu0 0.0
    %1306 = vmatmul.mubr.f32.gmra.mxu0 %v1227
    %v1307 = vpop.f32.mrf.mxu0
    %v1308 = vadd.f32 0.0, %v1307
    %v1309 = vpop.f32.mrf.mxu0
    %v1310 = vadd.f32 0.0, %v1309
    %1311 = vdwg.mxu0
    %1312 = vmatprep.subr.mxu0 0.0
    %1313 = vmatpush1.msra.mxu0 0.0
    %1314 = vmatprep.subr.mxu0 0.0
    %1315 = vmatpush1.msra.mxu0 0.0
    %1316 = vmatprep.subr.mxu0 0.0
    %1317 = vmatpush1.msra.mxu0 0.0
    %1318 = vmatprep.subr.mxu0 0.0
    %1319 = vmatpush1.msra.mxu0 0.0
    %1320 = vmatprep.subr.mxu0 0.0
    %1321 = vmatpush1.msra.mxu0 0.0
    %1322 = vmatprep.subr.mxu0 0.0
    %1323 = vmatpush1.msra.mxu0 0.0
    %1324 = vmatprep.subr.mxu0 0.0
    %1325 = vmatpush1.msra.mxu0 0.0
    %1326 = vmatprep.subr.mxu0 0.0
    %1327 = vmatpush1.msra.mxu0 0.0
    %1328 = vmatprep.subr.mxu0 0.0
    %1329 = vmatpush1.msra.mxu0 0.0
    %1330 = vmatprep.subr.mxu0 0.0
    %1331 = vmatpush1.msra.mxu0 0.0
    %1332 = vmatprep.subr.mxu0 0.0
    %1333 = vmatpush1.msra.mxu0 0.0
    %1334 = vmatprep.subr.mxu0 0.0
    %1335 = vmatpush1.msra.mxu0 0.0
    %1336 = vmatprep.subr.mxu0 0.0
    %1337 = vmatpush1.msra.mxu0 0.0
    %1338 = vmatprep.subr.mxu0 0.0
    %1339 = vmatpush1.msra.mxu0 0.0
    %1340 = vmatprep.subr.mxu0 0.0
    %1341 = vmatpush1.msra.mxu0 0.0
    %1342 = vmatprep.subr.mxu0 %v1239
    %1343 = vmatpush1.msra.mxu0 %v1236
    %1344 = vmatprep.subr.mxu0 0.0
    %1345 = vmatpush2.msra.mxu0 0.0
    %1346 = vmatprep.subr.mxu0 0.0
    %1347 = vmatpush2.msra.mxu0 0.0
    %1348 = vmatprep.subr.mxu0 0.0
    %1349 = vmatpush2.msra.mxu0 0.0
    %1350 = vmatprep.subr.mxu0 0.0
    %1351 = vmatpush2.msra.mxu0 0.0
    %1352 = vmatprep.subr.mxu0 0.0
    %1353 = vmatpush2.msra.mxu0 0.0
    %1354 = vmatprep.subr.mxu0 0.0
    %1355 = vmatpush2.msra.mxu0 0.0
    %1356 = vmatprep.subr.mxu0 0.0
    %1357 = vmatpush2.msra.mxu0 0.0
    %1358 = vmatprep.subr.mxu0 0.0
    %1359 = vmatpush2.msra.mxu0 0.0
    %1360 = vmatprep.subr.mxu0 0.0
    %1361 = vmatpush2.msra.mxu0 0.0
    %1362 = vmatprep.subr.mxu0 0.0
    %1363 = vmatpush2.msra.mxu0 0.0
    %1364 = vmatprep.subr.mxu0 0.0
    %1365 = vmatpush2.msra.mxu0 0.0
    %1366 = vmatprep.subr.mxu0 0.0
    %1367 = vmatpush2.msra.mxu0 0.0
    %1368 = vmatprep.subr.mxu0 0.0
    %1369 = vmatpush2.msra.mxu0 0.0
    %1370 = vmatprep.subr.mxu0 0.0
    %1371 = vmatpush2.msra.mxu0 0.0
    %1372 = vmatprep.subr.mxu0 0.0
    %1373 = vmatpush2.msra.mxu0 0.0
    %1374 = vmatprep.subr.mxu0 0.0
    %1375 = vmatpush2.msra.mxu0 0.0
    %1376 = vmatprep.mubr.f32.mxu0 0.0
    %1377 = vmatmul.mubr.f32.gmra.mxu0 %v1227
    %v1378 = vpop.f32.mrf.mxu0
    %v1379 = vadd.f32 0.0, %v1378
    %v1380 = vpop.f32.mrf.mxu0
    %v1381 = vadd.f32 0.0, %v1380
    %1382 = vdwg.mxu0
    %v1383 = vadd.f32 %v1198, %v1308
    %v1384 = vadd.f32 %v1199, %v1310
    %v1385 = vadd.f32 %v1200, %v1379
    %v1386 = vadd.f32 %v1201, %v1381
    %s1387 = scalar_lea.vmem %s2, 16
    %v1388 = vld [vmem:[%s1387] sm:$0xf]
    %v1390 = vsel %vm60, %v1388, 0
    %v1392 = vsel %vm67, %v530, 0
    %v1394 = vsel %vm67, %v531, 0
    %v1396 = vsel %vm67, %v532, 0
    %v1398 = vsel %vm67, %v533, 0
    %1400 = vmatprep.subr.mxu0 0.0
    %1401 = vmatpush1.msra.mxu0 0.0
    %1402 = vmatprep.subr.mxu0 0.0
    %1403 = vmatpush1.msra.mxu0 0.0
    %1404 = vmatprep.subr.mxu0 0.0
    %1405 = vmatpush1.msra.mxu0 0.0
    %1406 = vmatprep.subr.mxu0 0.0
    %1407 = vmatpush1.msra.mxu0 0.0
    %1408 = vmatprep.subr.mxu0 0.0
    %1409 = vmatpush1.msra.mxu0 0.0
    %1410 = vmatprep.subr.mxu0 0.0
    %1411 = vmatpush1.msra.mxu0 0.0
    %1412 = vmatprep.subr.mxu0 0.0
    %1413 = vmatpush1.msra.mxu0 0.0
    %1414 = vmatprep.subr.mxu0 0.0
    %1415 = vmatpush1.msra.mxu0 0.0
    %1416 = vmatprep.subr.mxu0 0.0
    %1417 = vmatpush1.msra.mxu0 0.0
    %1418 = vmatprep.subr.mxu0 0.0
    %1419 = vmatpush1.msra.mxu0 0.0
    %1420 = vmatprep.subr.mxu0 0.0
    %1421 = vmatpush1.msra.mxu0 0.0
    %1422 = vmatprep.subr.mxu0 0.0
    %1423 = vmatpush1.msra.mxu0 0.0
    %1424 = vmatprep.subr.mxu0 0.0
    %1425 = vmatpush1.msra.mxu0 0.0
    %1426 = vmatprep.subr.mxu0 0.0
    %1427 = vmatpush1.msra.mxu0 0.0
    %1428 = vmatprep.subr.mxu0 0.0
    %1429 = vmatpush1.msra.mxu0 0.0
    %1430 = vmatprep.subr.mxu0 %v1394
    %1431 = vmatpush1.msra.mxu0 %v1392
    %1432 = vmatprep.subr.mxu0 0.0
    %1433 = vmatpush2.msra.mxu0 0.0
    %1434 = vmatprep.subr.mxu0 0.0
    %1435 = vmatpush2.msra.mxu0 0.0
    %1436 = vmatprep.subr.mxu0 0.0
    %1437 = vmatpush2.msra.mxu0 0.0
    %1438 = vmatprep.subr.mxu0 0.0
    %1439 = vmatpush2.msra.mxu0 0.0
    %1440 = vmatprep.subr.mxu0 0.0
    %1441 = vmatpush2.msra.mxu0 0.0
    %1442 = vmatprep.subr.mxu0 0.0
    %1443 = vmatpush2.msra.mxu0 0.0
    %1444 = vmatprep.subr.mxu0 0.0
    %1445 = vmatpush2.msra.mxu0 0.0
    %1446 = vmatprep.subr.mxu0 0.0
    %1447 = vmatpush2.msra.mxu0 0.0
    %1448 = vmatprep.subr.mxu0 0.0
    %1449 = vmatpush2.msra.mxu0 0.0
    %1450 = vmatprep.subr.mxu0 0.0
    %1451 = vmatpush2.msra.mxu0 0.0
    %1452 = vmatprep.subr.mxu0 0.0
    %1453 = vmatpush2.msra.mxu0 0.0
    %1454 = vmatprep.subr.mxu0 0.0
    %1455 = vmatpush2.msra.mxu0 0.0
    %1456 = vmatprep.subr.mxu0 0.0
    %1457 = vmatpush2.msra.mxu0 0.0
    %1458 = vmatprep.subr.mxu0 0.0
    %1459 = vmatpush2.msra.mxu0 0.0
    %1460 = vmatprep.subr.mxu0 0.0
    %1461 = vmatpush2.msra.mxu0 0.0
    %1462 = vmatprep.subr.mxu0 0.0
    %1463 = vmatpush2.msra.mxu0 0.0
    %1464 = vmatprep.mubr.f32.mxu0 0.0
    %1465 = vmatmul.mubr.f32.gmra.mxu0 %v1390
    %v1466 = vpop.f32.mrf.mxu0
    %v1467 = vadd.f32 0.0, %v1466
    %v1468 = vpop.f32.mrf.mxu0
    %v1469 = vadd.f32 0.0, %v1468
    %1470 = vdwg.mxu0
    %1471 = vmatprep.subr.mxu0 0.0
    %1472 = vmatpush1.msra.mxu0 0.0
    %1473 = vmatprep.subr.mxu0 0.0
    %1474 = vmatpush1.msra.mxu0 0.0
    %1475 = vmatprep.subr.mxu0 0.0
    %1476 = vmatpush1.msra.mxu0 0.0
    %1477 = vmatprep.subr.mxu0 0.0
    %1478 = vmatpush1.msra.mxu0 0.0
    %1479 = vmatprep.subr.mxu0 0.0
    %1480 = vmatpush1.msra.mxu0 0.0
    %1481 = vmatprep.subr.mxu0 0.0
    %1482 = vmatpush1.msra.mxu0 0.0
    %1483 = vmatprep.subr.mxu0 0.0
    %1484 = vmatpush1.msra.mxu0 0.0
    %1485 = vmatprep.subr.mxu0 0.0
    %1486 = vmatpush1.msra.mxu0 0.0
    %1487 = vmatprep.subr.mxu0 0.0
    %1488 = vmatpush1.msra.mxu0 0.0
    %1489 = vmatprep.subr.mxu0 0.0
    %1490 = vmatpush1.msra.mxu0 0.0
    %1491 = vmatprep.subr.mxu0 0.0
    %1492 = vmatpush1.msra.mxu0 0.0
    %1493 = vmatprep.subr.mxu0 0.0
    %1494 = vmatpush1.msra.mxu0 0.0
    %1495 = vmatprep.subr.mxu0 0.0
    %1496 = vmatpush1.msra.mxu0 0.0
    %1497 = vmatprep.subr.mxu0 0.0
    %1498 = vmatpush1.msra.mxu0 0.0
    %1499 = vmatprep.subr.mxu0 0.0
    %1500 = vmatpush1.msra.mxu0 0.0
    %1501 = vmatprep.subr.mxu0 %v1398
    %1502 = vmatpush1.msra.mxu0 %v1396
    %1503 = vmatprep.subr.mxu0 0.0
    %1504 = vmatpush2.msra.mxu0 0.0
    %1505 = vmatprep.subr.mxu0 0.0
    %1506 = vmatpush2.msra.mxu0 0.0
    %1507 = vmatprep.subr.mxu0 0.0
    %1508 = vmatpush2.msra.mxu0 0.0
    %1509 = vmatprep.subr.mxu0 0.0
    %1510 = vmatpush2.msra.mxu0 0.0
    %1511 = vmatprep.subr.mxu0 0.0
    %1512 = vmatpush2.msra.mxu0 0.0
    %1513 = vmatprep.subr.mxu0 0.0
    %1514 = vmatpush2.msra.mxu0 0.0
    %1515 = vmatprep.subr.mxu0 0.0
    %1516 = vmatpush2.msra.mxu0 0.0
    %1517 = vmatprep.subr.mxu0 0.0
    %1518 = vmatpush2.msra.mxu0 0.0
    %1519 = vmatprep.subr.mxu0 0.0
    %1520 = vmatpush2.msra.mxu0 0.0
    %1521 = vmatprep.subr.mxu0 0.0
    %1522 = vmatpush2.msra.mxu0 0.0
    %1523 = vmatprep.subr.mxu0 0.0
    %1524 = vmatpush2.msra.mxu0 0.0
    %1525 = vmatprep.subr.mxu0 0.0
    %1526 = vmatpush2.msra.mxu0 0.0
    %1527 = vmatprep.subr.mxu0 0.0
    %1528 = vmatpush2.msra.mxu0 0.0
    %1529 = vmatprep.subr.mxu0 0.0
    %1530 = vmatpush2.msra.mxu0 0.0
    %1531 = vmatprep.subr.mxu0 0.0
    %1532 = vmatpush2.msra.mxu0 0.0
    %1533 = vmatprep.subr.mxu0 0.0
    %1534 = vmatpush2.msra.mxu0 0.0
    %1535 = vmatprep.mubr.f32.mxu0 0.0
    %1536 = vmatmul.mubr.f32.gmra.mxu0 %v1390
    %v1537 = vpop.f32.mrf.mxu0
    %v1538 = vadd.f32 0.0, %v1537
    %v1539 = vpop.f32.mrf.mxu0
    %v1540 = vadd.f32 0.0, %v1539
    %1541 = vdwg.mxu0
    %v1542 = vadd.f32 %v1383, %v1467
    %v1543 = vadd.f32 %v1384, %v1469
    %v1544 = vadd.f32 %v1385, %v1538
    %v1545 = vadd.f32 %v1386, %v1540
    %1546 = vrot.lane.b32.xlu0 %v530, 127
    %v1547 = vpop.permute.xlu0 %1546
    %1548 = vrot.lane.b32.xlu0 %v531, 127
    %v1549 = vpop.permute.xlu0 %1548
    %1550 = vrot.lane.b32.xlu0 %v532, 127
    %v1551 = vpop.permute.xlu0 %1550
    %1552 = vrot.lane.b32.xlu0 %v533, 127
    %v1553 = vpop.permute.xlu0 %1552
    %vm1554 = vcmask 1039360
    %v1555 = vsel %vm1554, %v1547, %v1549
    %v1556 = vsel %vm1554, %v1549, %v1551
    %v1557 = vsel %vm1554, %v1551, %v1553
    %v1563 = vsel %vm1554, %v1553, %v1547
    %v1564 = vmul.f32 %v1555, %v1022
    %v1565 = vmul.f32 %v1556, %v1026
    %v1566 = vmul.f32 %v1557, %v1030
    %v1567 = vmul.f32 %v1563, %v1034
    %s1568 = scalar_lea.vmem %s2, 20
    %v1569 = vld [vmem:[%s1568] sm:$0xf]
    %v1571 = vsel %vm60, %v1569, 0
    %v1574 = vsel %vm67, %v1564, 0
    %v1577 = vsel %vm67, %v1565, 0
    %v1580 = vsel %vm67, %v1566, 0
    %v1583 = vsel %vm67, %v1567, 0
    %1585 = vmatprep.subr.mxu0 0.0
    %1586 = vmatpush1.msra.mxu0 0.0
    %1587 = vmatprep.subr.mxu0 0.0
    %1588 = vmatpush1.msra.mxu0 0.0
    %1589 = vmatprep.subr.mxu0 0.0
    %1590 = vmatpush1.msra.mxu0 0.0
    %1591 = vmatprep.subr.mxu0 0.0
    %1592 = vmatpush1.msra.mxu0 0.0
    %1593 = vmatprep.subr.mxu0 0.0
    %1594 = vmatpush1.msra.mxu0 0.0
    %1595 = vmatprep.subr.mxu0 0.0
    %1596 = vmatpush1.msra.mxu0 0.0
    %1597 = vmatprep.subr.mxu0 0.0
    %1598 = vmatpush1.msra.mxu0 0.0
    %1599 = vmatprep.subr.mxu0 0.0
    %1600 = vmatpush1.msra.mxu0 0.0
    %1601 = vmatprep.subr.mxu0 0.0
    %1602 = vmatpush1.msra.mxu0 0.0
    %1603 = vmatprep.subr.mxu0 0.0
    %1604 = vmatpush1.msra.mxu0 0.0
    %1605 = vmatprep.subr.mxu0 0.0
    %1606 = vmatpush1.msra.mxu0 0.0
    %1607 = vmatprep.subr.mxu0 0.0
    %1608 = vmatpush1.msra.mxu0 0.0
    %1609 = vmatprep.subr.mxu0 0.0
    %1610 = vmatpush1.msra.mxu0 0.0
    %1611 = vmatprep.subr.mxu0 0.0
    %1612 = vmatpush1.msra.mxu0 0.0
    %1613 = vmatprep.subr.mxu0 0.0
    %1614 = vmatpush1.msra.mxu0 0.0
    %1615 = vmatprep.subr.mxu0 %v1577
    %1616 = vmatpush1.msra.mxu0 %v1574
    %1617 = vmatprep.subr.mxu0 0.0
    %1618 = vmatpush2.msra.mxu0 0.0
    %1619 = vmatprep.subr.mxu0 0.0
    %1620 = vmatpush2.msra.mxu0 0.0
    %1621 = vmatprep.subr.mxu0 0.0
    %1622 = vmatpush2.msra.mxu0 0.0
    %1623 = vmatprep.subr.mxu0 0.0
    %1624 = vmatpush2.msra.mxu0 0.0
    %1625 = vmatprep.subr.mxu0 0.0
    %1626 = vmatpush2.msra.mxu0 0.0
    %1627 = vmatprep.subr.mxu0 0.0
    %1628 = vmatpush2.msra.mxu0 0.0
    %1629 = vmatprep.subr.mxu0 0.0
    %1630 = vmatpush2.msra.mxu0 0.0
    %1631 = vmatprep.subr.mxu0 0.0
    %1632 = vmatpush2.msra.mxu0 0.0
    %1633 = vmatprep.subr.mxu0 0.0
    %1634 = vmatpush2.msra.mxu0 0.0
    %1635 = vmatprep.subr.mxu0 0.0
    %1636 = vmatpush2.msra.mxu0 0.0
    %1637 = vmatprep.subr.mxu0 0.0
    %1638 = vmatpush2.msra.mxu0 0.0
    %1639 = vmatprep.subr.mxu0 0.0
    %1640 = vmatpush2.msra.mxu0 0.0
    %1641 = vmatprep.subr.mxu0 0.0
    %1642 = vmatpush2.msra.mxu0 0.0
    %1643 = vmatprep.subr.mxu0 0.0
    %1644 = vmatpush2.msra.mxu0 0.0
    %1645 = vmatprep.subr.mxu0 0.0
    %1646 = vmatpush2.msra.mxu0 0.0
    %1647 = vmatprep.subr.mxu0 0.0
    %1648 = vmatpush2.msra.mxu0 0.0
    %1649 = vmatprep.mubr.f32.mxu0 0.0
    %1650 = vmatmul.mubr.f32.gmra.mxu0 %v1571
    %v1651 = vpop.f32.mrf.mxu0
    %v1652 = vadd.f32 0.0, %v1651
    %v1653 = vpop.f32.mrf.mxu0
    %v1654 = vadd.f32 0.0, %v1653
    %1655 = vdwg.mxu0
    %1656 = vmatprep.subr.mxu0 0.0
    %1657 = vmatpush1.msra.mxu0 0.0
    %1658 = vmatprep.subr.mxu0 0.0
    %1659 = vmatpush1.msra.mxu0 0.0
    %1660 = vmatprep.subr.mxu0 0.0
    %1661 = vmatpush1.msra.mxu0 0.0
    %1662 = vmatprep.subr.mxu0 0.0
    %1663 = vmatpush1.msra.mxu0 0.0
    %1664 = vmatprep.subr.mxu0 0.0
    %1665 = vmatpush1.msra.mxu0 0.0
    %1666 = vmatprep.subr.mxu0 0.0
    %1667 = vmatpush1.msra.mxu0 0.0
    %1668 = vmatprep.subr.mxu0 0.0
    %1669 = vmatpush1.msra.mxu0 0.0
    %1670 = vmatprep.subr.mxu0 0.0
    %1671 = vmatpush1.msra.mxu0 0.0
    %1672 = vmatprep.subr.mxu0 0.0
    %1673 = vmatpush1.msra.mxu0 0.0
    %1674 = vmatprep.subr.mxu0 0.0
    %1675 = vmatpush1.msra.mxu0 0.0
    %1676 = vmatprep.subr.mxu0 0.0
    %1677 = vmatpush1.msra.mxu0 0.0
    %1678 = vmatprep.subr.mxu0 0.0
    %1679 = vmatpush1.msra.mxu0 0.0
    %1680 = vmatprep.subr.mxu0 0.0
    %1681 = vmatpush1.msra.mxu0 0.0
    %1682 = vmatprep.subr.mxu0 0.0
    %1683 = vmatpush1.msra.mxu0 0.0
    %1684 = vmatprep.subr.mxu0 0.0
    %1685 = vmatpush1.msra.mxu0 0.0
    %1686 = vmatprep.subr.mxu0 %v1583
    %1687 = vmatpush1.msra.mxu0 %v1580
    %1688 = vmatprep.subr.mxu0 0.0
    %1689 = vmatpush2.msra.mxu0 0.0
    %1690 = vmatprep.subr.mxu0 0.0
    %1691 = vmatpush2.msra.mxu0 0.0
    %1692 = vmatprep.subr.mxu0 0.0
    %1693 = vmatpush2.msra.mxu0 0.0
    %1694 = vmatprep.subr.mxu0 0.0
    %1695 = vmatpush2.msra.mxu0 0.0
    %1696 = vmatprep.subr.mxu0 0.0
    %1697 = vmatpush2.msra.mxu0 0.0
    %1698 = vmatprep.subr.mxu0 0.0
    %1699 = vmatpush2.msra.mxu0 0.0
    %1700 = vmatprep.subr.mxu0 0.0
    %1701 = vmatpush2.msra.mxu0 0.0
    %1702 = vmatprep.subr.mxu0 0.0
    %1703 = vmatpush2.msra.mxu0 0.0
    %1704 = vmatprep.subr.mxu0 0.0
    %1705 = vmatpush2.msra.mxu0 0.0
    %1706 = vmatprep.subr.mxu0 0.0
    %1707 = vmatpush2.msra.mxu0 0.0
    %1708 = vmatprep.subr.mxu0 0.0
    %1709 = vmatpush2.msra.mxu0 0.0
    %1710 = vmatprep.subr.mxu0 0.0
    %1711 = vmatpush2.msra.mxu0 0.0
    %1712 = vmatprep.subr.mxu0 0.0
    %1713 = vmatpush2.msra.mxu0 0.0
    %1714 = vmatprep.subr.mxu0 0.0
    %1715 = vmatpush2.msra.mxu0 0.0
    %1716 = vmatprep.subr.mxu0 0.0
    %1717 = vmatpush2.msra.mxu0 0.0
    %1718 = vmatprep.subr.mxu0 0.0
    %1719 = vmatpush2.msra.mxu0 0.0
    %1720 = vmatprep.mubr.f32.mxu0 0.0
    %1721 = vmatmul.mubr.f32.gmra.mxu0 %v1571
    %v1722 = vpop.f32.mrf.mxu0
    %v1723 = vadd.f32 0.0, %v1722
    %v1724 = vpop.f32.mrf.mxu0
    %v1725 = vadd.f32 0.0, %v1724
    %1726 = vdwg.mxu0
    %v1727 = vadd.f32 %v1542, %v1652
    %v1728 = vadd.f32 %v1543, %v1654
    %v1729 = vadd.f32 %v1544, %v1723
    %v1730 = vadd.f32 %v1545, %v1725
    %1731 = vrot.lane.b32.xlu0 %v530, 113
    %v1732 = vpop.permute.xlu0 %1731
    %1733 = vrot.lane.b32.xlu0 %v531, 113
    %v1734 = vpop.permute.xlu0 %1733
    %1735 = vrot.lane.b32.xlu0 %v532, 113
    %v1736 = vpop.permute.xlu0 %1735
    %1737 = vrot.lane.b32.xlu0 %v533, 113
    %v1738 = vpop.permute.xlu0 %1737
    %vm1739 = vcmask 924672
    %v1740 = vsel %vm1739, %v1732, %v1734
    %v1741 = vsel %vm1739, %v1734, %v1736
    %v1742 = vsel %vm1739, %v1736, %v1738
    %v1748 = vsel %vm1739, %v1738, %v1732
    %v1749 = vlaneseq
    %v1750 = vshrl.u32 %v1749, 7
    %v1751 = vsub.s32 1, %v1750
    %v1752 = vrot.slane %v52, %v1751
    %v1753 = vlaneseq
    %v1754 = vshrl.u32 %v1753, 7
    %v1755 = vsub.s32 5, %v1754
    %v1756 = vrot.slane %v52, %v1755
    %v1757 = vlaneseq
    %v1758 = vshrl.u32 %v1757, 7
    %v1759 = vsub.s32 1, %v1758
    %v1760 = vrot.slane %v53, %v1759
    %v1761 = vlaneseq
    %v1762 = vshrl.u32 %v1761, 7
    %v1763 = vsub.s32 5, %v1762
    %v1764 = vrot.slane %v53, %v1763
    %v1769 = vlaneseq
    %v1770 = vshrl.u32 %v1769, 7
    %v1771 = vsub.s32 1, %v1770
    %v1772 = vrot.slane %v1752, %v1771
    %v1773 = vlaneseq
    %v1774 = vshrl.u32 %v1773, 7
    %v1775 = vsub.s32 1, %v1774
    %v1776 = vrot.slane %v1756, %v1775
    %v1777 = vlaneseq
    %v1778 = vshrl.u32 %v1777, 7
    %v1779 = vsub.s32 1, %v1778
    %v1780 = vrot.slane %v1760, %v1779
    %v1781 = vlaneseq
    %v1782 = vshrl.u32 %v1781, 7
    %v1783 = vsub.s32 1, %v1782
    %v1784 = vrot.slane %v1764, %v1783
    %v1785 = vmul.f32 %v1740, %v1772
    %v1786 = vmul.f32 %v1741, %v1776
    %v1787 = vmul.f32 %v1742, %v1780
    %v1788 = vmul.f32 %v1748, %v1784
    %v1789 = vmul.f32 %v1785, %v621
    %v1790 = vmul.f32 %v1786, %v625
    %v1791 = vmul.f32 %v1787, %v629
    %v1792 = vmul.f32 %v1788, %v633
    %s1793 = scalar_lea.vmem %s2, 24
    %v1794 = vld [vmem:[%s1793] sm:$0xf]
    %v1796 = vsel %vm60, %v1794, 0
    %v1799 = vsel %vm67, %v1789, 0
    %v1802 = vsel %vm67, %v1790, 0
    %v1805 = vsel %vm67, %v1791, 0
    %v1808 = vsel %vm67, %v1792, 0
    %1810 = vmatprep.subr.mxu0 0.0
    %1811 = vmatpush1.msra.mxu0 0.0
    %1812 = vmatprep.subr.mxu0 0.0
    %1813 = vmatpush1.msra.mxu0 0.0
    %1814 = vmatprep.subr.mxu0 0.0
    %1815 = vmatpush1.msra.mxu0 0.0
    %1816 = vmatprep.subr.mxu0 0.0
    %1817 = vmatpush1.msra.mxu0 0.0
    %1818 = vmatprep.subr.mxu0 0.0
    %1819 = vmatpush1.msra.mxu0 0.0
    %1820 = vmatprep.subr.mxu0 0.0
    %1821 = vmatpush1.msra.mxu0 0.0
    %1822 = vmatprep.subr.mxu0 0.0
    %1823 = vmatpush1.msra.mxu0 0.0
    %1824 = vmatprep.subr.mxu0 0.0
    %1825 = vmatpush1.msra.mxu0 0.0
    %1826 = vmatprep.subr.mxu0 0.0
    %1827 = vmatpush1.msra.mxu0 0.0
    %1828 = vmatprep.subr.mxu0 0.0
    %1829 = vmatpush1.msra.mxu0 0.0
    %1830 = vmatprep.subr.mxu0 0.0
    %1831 = vmatpush1.msra.mxu0 0.0
    %1832 = vmatprep.subr.mxu0 0.0
    %1833 = vmatpush1.msra.mxu0 0.0
    %1834 = vmatprep.subr.mxu0 0.0
    %1835 = vmatpush1.msra.mxu0 0.0
    %1836 = vmatprep.subr.mxu0 0.0
    %1837 = vmatpush1.msra.mxu0 0.0
    %1838 = vmatprep.subr.mxu0 0.0
    %1839 = vmatpush1.msra.mxu0 0.0
    %1840 = vmatprep.subr.mxu0 %v1802
    %1841 = vmatpush1.msra.mxu0 %v1799
    %1842 = vmatprep.subr.mxu0 0.0
    %1843 = vmatpush2.msra.mxu0 0.0
    %1844 = vmatprep.subr.mxu0 0.0
    %1845 = vmatpush2.msra.mxu0 0.0
    %1846 = vmatprep.subr.mxu0 0.0
    %1847 = vmatpush2.msra.mxu0 0.0
    %1848 = vmatprep.subr.mxu0 0.0
    %1849 = vmatpush2.msra.mxu0 0.0
    %1850 = vmatprep.subr.mxu0 0.0
    %1851 = vmatpush2.msra.mxu0 0.0
    %1852 = vmatprep.subr.mxu0 0.0
    %1853 = vmatpush2.msra.mxu0 0.0
    %1854 = vmatprep.subr.mxu0 0.0
    %1855 = vmatpush2.msra.mxu0 0.0
    %1856 = vmatprep.subr.mxu0 0.0
    %1857 = vmatpush2.msra.mxu0 0.0
    %1858 = vmatprep.subr.mxu0 0.0
    %1859 = vmatpush2.msra.mxu0 0.0
    %1860 = vmatprep.subr.mxu0 0.0
    %1861 = vmatpush2.msra.mxu0 0.0
    %1862 = vmatprep.subr.mxu0 0.0
    %1863 = vmatpush2.msra.mxu0 0.0
    %1864 = vmatprep.subr.mxu0 0.0
    %1865 = vmatpush2.msra.mxu0 0.0
    %1866 = vmatprep.subr.mxu0 0.0
    %1867 = vmatpush2.msra.mxu0 0.0
    %1868 = vmatprep.subr.mxu0 0.0
    %1869 = vmatpush2.msra.mxu0 0.0
    %1870 = vmatprep.subr.mxu0 0.0
    %1871 = vmatpush2.msra.mxu0 0.0
    %1872 = vmatprep.subr.mxu0 0.0
    %1873 = vmatpush2.msra.mxu0 0.0
    %1874 = vmatprep.mubr.f32.mxu0 0.0
    %1875 = vmatmul.mubr.f32.gmra.mxu0 %v1796
    %v1876 = vpop.f32.mrf.mxu0
    %v1877 = vadd.f32 0.0, %v1876
    %v1878 = vpop.f32.mrf.mxu0
    %v1879 = vadd.f32 0.0, %v1878
    %1880 = vdwg.mxu0
    %1881 = vmatprep.subr.mxu0 0.0
    %1882 = vmatpush1.msra.mxu0 0.0
    %1883 = vmatprep.subr.mxu0 0.0
    %1884 = vmatpush1.msra.mxu0 0.0
    %1885 = vmatprep.subr.mxu0 0.0
    %1886 = vmatpush1.msra.mxu0 0.0
    %1887 = vmatprep.subr.mxu0 0.0
    %1888 = vmatpush1.msra.mxu0 0.0
    %1889 = vmatprep.subr.mxu0 0.0
    %1890 = vmatpush1.msra.mxu0 0.0
    %1891 = vmatprep.subr.mxu0 0.0
    %1892 = vmatpush1.msra.mxu0 0.0
    %1893 = vmatprep.subr.mxu0 0.0
    %1894 = vmatpush1.msra.mxu0 0.0
    %1895 = vmatprep.subr.mxu0 0.0
    %1896 = vmatpush1.msra.mxu0 0.0
    %1897 = vmatprep.subr.mxu0 0.0
    %1898 = vmatpush1.msra.mxu0 0.0
    %1899 = vmatprep.subr.mxu0 0.0
    %1900 = vmatpush1.msra.mxu0 0.0
    %1901 = vmatprep.subr.mxu0 0.0
    %1902 = vmatpush1.msra.mxu0 0.0
    %1903 = vmatprep.subr.mxu0 0.0
    %1904 = vmatpush1.msra.mxu0 0.0
    %1905 = vmatprep.subr.mxu0 0.0
    %1906 = vmatpush1.msra.mxu0 0.0
    %1907 = vmatprep.subr.mxu0 0.0
    %1908 = vmatpush1.msra.mxu0 0.0
    %1909 = vmatprep.subr.mxu0 0.0
    %1910 = vmatpush1.msra.mxu0 0.0
    %1911 = vmatprep.subr.mxu0 %v1808
    %1912 = vmatpush1.msra.mxu0 %v1805
    %1913 = vmatprep.subr.mxu0 0.0
    %1914 = vmatpush2.msra.mxu0 0.0
    %1915 = vmatprep.subr.mxu0 0.0
    %1916 = vmatpush2.msra.mxu0 0.0
    %1917 = vmatprep.subr.mxu0 0.0
    %1918 = vmatpush2.msra.mxu0 0.0
    %1919 = vmatprep.subr.mxu0 0.0
    %1920 = vmatpush2.msra.mxu0 0.0
    %1921 = vmatprep.subr.mxu0 0.0
    %1922 = vmatpush2.msra.mxu0 0.0
    %1923 = vmatprep.subr.mxu0 0.0
    %1924 = vmatpush2.msra.mxu0 0.0
    %1925 = vmatprep.subr.mxu0 0.0
    %1926 = vmatpush2.msra.mxu0 0.0
    %1927 = vmatprep.subr.mxu0 0.0
    %1928 = vmatpush2.msra.mxu0 0.0
    %1929 = vmatprep.subr.mxu0 0.0
    %1930 = vmatpush2.msra.mxu0 0.0
    %1931 = vmatprep.subr.mxu0 0.0
    %1932 = vmatpush2.msra.mxu0 0.0
    %1933 = vmatprep.subr.mxu0 0.0
    %1934 = vmatpush2.msra.mxu0 0.0
    %1935 = vmatprep.subr.mxu0 0.0
    %1936 = vmatpush2.msra.mxu0 0.0
    %1937 = vmatprep.subr.mxu0 0.0
    %1938 = vmatpush2.msra.mxu0 0.0
    %1939 = vmatprep.subr.mxu0 0.0
    %1940 = vmatpush2.msra.mxu0 0.0
    %1941 = vmatprep.subr.mxu0 0.0
    %1942 = vmatpush2.msra.mxu0 0.0
    %1943 = vmatprep.subr.mxu0 0.0
    %1944 = vmatpush2.msra.mxu0 0.0
    %1945 = vmatprep.mubr.f32.mxu0 0.0
    %1946 = vmatmul.mubr.f32.gmra.mxu0 %v1796
    %v1947 = vpop.f32.mrf.mxu0
    %v1948 = vadd.f32 0.0, %v1947
    %v1949 = vpop.f32.mrf.mxu0
    %v1950 = vadd.f32 0.0, %v1949
    %1951 = vdwg.mxu0
    %v1952 = vadd.f32 %v1727, %v1877
    %v1953 = vadd.f32 %v1728, %v1879
    %v1954 = vadd.f32 %v1729, %v1948
    %v1955 = vadd.f32 %v1730, %v1950
    %1956 = vrot.lane.b32.xlu0 %v530, 112
    %v1957 = vpop.permute.xlu0 %1956
    %1958 = vrot.lane.b32.xlu0 %v531, 112
    %v1959 = vpop.permute.xlu0 %1958
    %1960 = vrot.lane.b32.xlu0 %v532, 112
    %v1961 = vpop.permute.xlu0 %1960
    %1962 = vrot.lane.b32.xlu0 %v533, 112
    %v1963 = vpop.permute.xlu0 %1962
    %vm1964 = vcmask 916480
    %v1965 = vsel %vm1964, %v1957, %v1959
    %v1966 = vsel %vm1964, %v1959, %v1961
    %v1967 = vsel %vm1964, %v1961, %v1963
    %v1973 = vsel %vm1964, %v1963, %v1957
    %v1974 = vmul.f32 %v1965, %v1772
    %v1975 = vmul.f32 %v1966, %v1776
    %v1976 = vmul.f32 %v1967, %v1780
    %v1977 = vmul.f32 %v1973, %v1784
    %s1978 = scalar_lea.vmem %s2, 28
    %v1979 = vld [vmem:[%s1978] sm:$0xf]
    %v1981 = vsel %vm60, %v1979, 0
    %v1984 = vsel %vm67, %v1974, 0
    %v1987 = vsel %vm67, %v1975, 0
    %v1990 = vsel %vm67, %v1976, 0
    %v1993 = vsel %vm67, %v1977, 0
    %1995 = vmatprep.subr.mxu0 0.0
    %1996 = vmatpush1.msra.mxu0 0.0
    %1997 = vmatprep.subr.mxu0 0.0
    %1998 = vmatpush1.msra.mxu0 0.0
    %1999 = vmatprep.subr.mxu0 0.0
    %2000 = vmatpush1.msra.mxu0 0.0
    %2001 = vmatprep.subr.mxu0 0.0
    %2002 = vmatpush1.msra.mxu0 0.0
    %2003 = vmatprep.subr.mxu0 0.0
    %2004 = vmatpush1.msra.mxu0 0.0
    %2005 = vmatprep.subr.mxu0 0.0
    %2006 = vmatpush1.msra.mxu0 0.0
    %2007 = vmatprep.subr.mxu0 0.0
    %2008 = vmatpush1.msra.mxu0 0.0
    %2009 = vmatprep.subr.mxu0 0.0
    %2010 = vmatpush1.msra.mxu0 0.0
    %2011 = vmatprep.subr.mxu0 0.0
    %2012 = vmatpush1.msra.mxu0 0.0
    %2013 = vmatprep.subr.mxu0 0.0
    %2014 = vmatpush1.msra.mxu0 0.0
    %2015 = vmatprep.subr.mxu0 0.0
    %2016 = vmatpush1.msra.mxu0 0.0
    %2017 = vmatprep.subr.mxu0 0.0
    %2018 = vmatpush1.msra.mxu0 0.0
    %2019 = vmatprep.subr.mxu0 0.0
    %2020 = vmatpush1.msra.mxu0 0.0
    %2021 = vmatprep.subr.mxu0 0.0
    %2022 = vmatpush1.msra.mxu0 0.0
    %2023 = vmatprep.subr.mxu0 0.0
    %2024 = vmatpush1.msra.mxu0 0.0
    %2025 = vmatprep.subr.mxu0 %v1987
    %2026 = vmatpush1.msra.mxu0 %v1984
    %2027 = vmatprep.subr.mxu0 0.0
    %2028 = vmatpush2.msra.mxu0 0.0
    %2029 = vmatprep.subr.mxu0 0.0
    %2030 = vmatpush2.msra.mxu0 0.0
    %2031 = vmatprep.subr.mxu0 0.0
    %2032 = vmatpush2.msra.mxu0 0.0
    %2033 = vmatprep.subr.mxu0 0.0
    %2034 = vmatpush2.msra.mxu0 0.0
    %2035 = vmatprep.subr.mxu0 0.0
    %2036 = vmatpush2.msra.mxu0 0.0
    %2037 = vmatprep.subr.mxu0 0.0
    %2038 = vmatpush2.msra.mxu0 0.0
    %2039 = vmatprep.subr.mxu0 0.0
    %2040 = vmatpush2.msra.mxu0 0.0
    %2041 = vmatprep.subr.mxu0 0.0
    %2042 = vmatpush2.msra.mxu0 0.0
    %2043 = vmatprep.subr.mxu0 0.0
    %2044 = vmatpush2.msra.mxu0 0.0
    %2045 = vmatprep.subr.mxu0 0.0
    %2046 = vmatpush2.msra.mxu0 0.0
    %2047 = vmatprep.subr.mxu0 0.0
    %2048 = vmatpush2.msra.mxu0 0.0
    %2049 = vmatprep.subr.mxu0 0.0
    %2050 = vmatpush2.msra.mxu0 0.0
    %2051 = vmatprep.subr.mxu0 0.0
    %2052 = vmatpush2.msra.mxu0 0.0
    %2053 = vmatprep.subr.mxu0 0.0
    %2054 = vmatpush2.msra.mxu0 0.0
    %2055 = vmatprep.subr.mxu0 0.0
    %2056 = vmatpush2.msra.mxu0 0.0
    %2057 = vmatprep.subr.mxu0 0.0
    %2058 = vmatpush2.msra.mxu0 0.0
    %2059 = vmatprep.mubr.f32.mxu0 0.0
    %2060 = vmatmul.mubr.f32.gmra.mxu0 %v1981
    %v2061 = vpop.f32.mrf.mxu0
    %v2062 = vadd.f32 0.0, %v2061
    %v2063 = vpop.f32.mrf.mxu0
    %v2064 = vadd.f32 0.0, %v2063
    %2065 = vdwg.mxu0
    %2066 = vmatprep.subr.mxu0 0.0
    %2067 = vmatpush1.msra.mxu0 0.0
    %2068 = vmatprep.subr.mxu0 0.0
    %2069 = vmatpush1.msra.mxu0 0.0
    %2070 = vmatprep.subr.mxu0 0.0
    %2071 = vmatpush1.msra.mxu0 0.0
    %2072 = vmatprep.subr.mxu0 0.0
    %2073 = vmatpush1.msra.mxu0 0.0
    %2074 = vmatprep.subr.mxu0 0.0
    %2075 = vmatpush1.msra.mxu0 0.0
    %2076 = vmatprep.subr.mxu0 0.0
    %2077 = vmatpush1.msra.mxu0 0.0
    %2078 = vmatprep.subr.mxu0 0.0
    %2079 = vmatpush1.msra.mxu0 0.0
    %2080 = vmatprep.subr.mxu0 0.0
    %2081 = vmatpush1.msra.mxu0 0.0
    %2082 = vmatprep.subr.mxu0 0.0
    %2083 = vmatpush1.msra.mxu0 0.0
    %2084 = vmatprep.subr.mxu0 0.0
    %2085 = vmatpush1.msra.mxu0 0.0
    %2086 = vmatprep.subr.mxu0 0.0
    %2087 = vmatpush1.msra.mxu0 0.0
    %2088 = vmatprep.subr.mxu0 0.0
    %2089 = vmatpush1.msra.mxu0 0.0
    %2090 = vmatprep.subr.mxu0 0.0
    %2091 = vmatpush1.msra.mxu0 0.0
    %2092 = vmatprep.subr.mxu0 0.0
    %2093 = vmatpush1.msra.mxu0 0.0
    %2094 = vmatprep.subr.mxu0 0.0
    %2095 = vmatpush1.msra.mxu0 0.0
    %2096 = vmatprep.subr.mxu0 %v1993
    %2097 = vmatpush1.msra.mxu0 %v1990
    %2098 = vmatprep.subr.mxu0 0.0
    %2099 = vmatpush2.msra.mxu0 0.0
    %2100 = vmatprep.subr.mxu0 0.0
    %2101 = vmatpush2.msra.mxu0 0.0
    %2102 = vmatprep.subr.mxu0 0.0
    %2103 = vmatpush2.msra.mxu0 0.0
    %2104 = vmatprep.subr.mxu0 0.0
    %2105 = vmatpush2.msra.mxu0 0.0
    %2106 = vmatprep.subr.mxu0 0.0
    %2107 = vmatpush2.msra.mxu0 0.0
    %2108 = vmatprep.subr.mxu0 0.0
    %2109 = vmatpush2.msra.mxu0 0.0
    %2110 = vmatprep.subr.mxu0 0.0
    %2111 = vmatpush2.msra.mxu0 0.0
    %2112 = vmatprep.subr.mxu0 0.0
    %2113 = vmatpush2.msra.mxu0 0.0
    %2114 = vmatprep.subr.mxu0 0.0
    %2115 = vmatpush2.msra.mxu0 0.0
    %2116 = vmatprep.subr.mxu0 0.0
    %2117 = vmatpush2.msra.mxu0 0.0
    %2118 = vmatprep.subr.mxu0 0.0
    %2119 = vmatpush2.msra.mxu0 0.0
    %2120 = vmatprep.subr.mxu0 0.0
    %2121 = vmatpush2.msra.mxu0 0.0
    %2122 = vmatprep.subr.mxu0 0.0
    %2123 = vmatpush2.msra.mxu0 0.0
    %2124 = vmatprep.subr.mxu0 0.0
    %2125 = vmatpush2.msra.mxu0 0.0
    %2126 = vmatprep.subr.mxu0 0.0
    %2127 = vmatpush2.msra.mxu0 0.0
    %2128 = vmatprep.subr.mxu0 0.0
    %2129 = vmatpush2.msra.mxu0 0.0
    %2130 = vmatprep.mubr.f32.mxu0 0.0
    %2131 = vmatmul.mubr.f32.gmra.mxu0 %v1981
    %v2132 = vpop.f32.mrf.mxu0
    %v2133 = vadd.f32 0.0, %v2132
    %v2134 = vpop.f32.mrf.mxu0
    %v2135 = vadd.f32 0.0, %v2134
    %2136 = vdwg.mxu0
    %v2137 = vadd.f32 %v1952, %v2062
    %v2138 = vadd.f32 %v1953, %v2064
    %v2139 = vadd.f32 %v1954, %v2133
    %v2140 = vadd.f32 %v1955, %v2135
    %2141 = vrot.lane.b32.xlu0 %v530, 111
    %v2142 = vpop.permute.xlu0 %2141
    %2143 = vrot.lane.b32.xlu0 %v531, 111
    %v2144 = vpop.permute.xlu0 %2143
    %2145 = vrot.lane.b32.xlu0 %v532, 111
    %v2146 = vpop.permute.xlu0 %2145
    %2147 = vrot.lane.b32.xlu0 %v533, 111
    %v2148 = vpop.permute.xlu0 %2147
    %vm2149 = vcmask 908288
    %v2150 = vsel %vm2149, %v2142, %v2144
    %v2151 = vsel %vm2149, %v2144, %v2146
    %v2152 = vsel %vm2149, %v2146, %v2148
    %v2158 = vsel %vm2149, %v2148, %v2142
    %v2159 = vmul.f32 %v2150, %v1772
    %v2160 = vmul.f32 %v2151, %v1776
    %v2161 = vmul.f32 %v2152, %v1780
    %v2162 = vmul.f32 %v2158, %v1784
    %v2163 = vmul.f32 %v2159, %v1022
    %v2164 = vmul.f32 %v2160, %v1026
    %v2165 = vmul.f32 %v2161, %v1030
    %v2166 = vmul.f32 %v2162, %v1034
    %s2167 = scalar_lea.vmem %s2, 32
    %v2168 = vld [vmem:[%s2167] sm:$0xf]
    %v2170 = vsel %vm60, %v2168, 0
    %v2173 = vsel %vm67, %v2163, 0
    %v2176 = vsel %vm67, %v2164, 0
    %v2179 = vsel %vm67, %v2165, 0
    %v2182 = vsel %vm67, %v2166, 0
    %2184 = vmatprep.subr.mxu0 0.0
    %2185 = vmatpush1.msra.mxu0 0.0
    %2186 = vmatprep.subr.mxu0 0.0
    %2187 = vmatpush1.msra.mxu0 0.0
    %2188 = vmatprep.subr.mxu0 0.0
    %2189 = vmatpush1.msra.mxu0 0.0
    %2190 = vmatprep.subr.mxu0 0.0
    %2191 = vmatpush1.msra.mxu0 0.0
    %2192 = vmatprep.subr.mxu0 0.0
    %2193 = vmatpush1.msra.mxu0 0.0
    %2194 = vmatprep.subr.mxu0 0.0
    %2195 = vmatpush1.msra.mxu0 0.0
    %2196 = vmatprep.subr.mxu0 0.0
    %2197 = vmatpush1.msra.mxu0 0.0
    %2198 = vmatprep.subr.mxu0 0.0
    %2199 = vmatpush1.msra.mxu0 0.0
    %2200 = vmatprep.subr.mxu0 0.0
    %2201 = vmatpush1.msra.mxu0 0.0
    %2202 = vmatprep.subr.mxu0 0.0
    %2203 = vmatpush1.msra.mxu0 0.0
    %2204 = vmatprep.subr.mxu0 0.0
    %2205 = vmatpush1.msra.mxu0 0.0
    %2206 = vmatprep.subr.mxu0 0.0
    %2207 = vmatpush1.msra.mxu0 0.0
    %2208 = vmatprep.subr.mxu0 0.0
    %2209 = vmatpush1.msra.mxu0 0.0
    %2210 = vmatprep.subr.mxu0 0.0
    %2211 = vmatpush1.msra.mxu0 0.0
    %2212 = vmatprep.subr.mxu0 0.0
    %2213 = vmatpush1.msra.mxu0 0.0
    %2214 = vmatprep.subr.mxu0 %v2176
    %2215 = vmatpush1.msra.mxu0 %v2173
    %2216 = vmatprep.subr.mxu0 0.0
    %2217 = vmatpush2.msra.mxu0 0.0
    %2218 = vmatprep.subr.mxu0 0.0
    %2219 = vmatpush2.msra.mxu0 0.0
    %2220 = vmatprep.subr.mxu0 0.0
    %2221 = vmatpush2.msra.mxu0 0.0
    %2222 = vmatprep.subr.mxu0 0.0
    %2223 = vmatpush2.msra.mxu0 0.0
    %2224 = vmatprep.subr.mxu0 0.0
    %2225 = vmatpush2.msra.mxu0 0.0
    %2226 = vmatprep.subr.mxu0 0.0
    %2227 = vmatpush2.msra.mxu0 0.0
    %2228 = vmatprep.subr.mxu0 0.0
    %2229 = vmatpush2.msra.mxu0 0.0
    %2230 = vmatprep.subr.mxu0 0.0
    %2231 = vmatpush2.msra.mxu0 0.0
    %2232 = vmatprep.subr.mxu0 0.0
    %2233 = vmatpush2.msra.mxu0 0.0
    %2234 = vmatprep.subr.mxu0 0.0
    %2235 = vmatpush2.msra.mxu0 0.0
    %2236 = vmatprep.subr.mxu0 0.0
    %2237 = vmatpush2.msra.mxu0 0.0
    %2238 = vmatprep.subr.mxu0 0.0
    %2239 = vmatpush2.msra.mxu0 0.0
    %2240 = vmatprep.subr.mxu0 0.0
    %2241 = vmatpush2.msra.mxu0 0.0
    %2242 = vmatprep.subr.mxu0 0.0
    %2243 = vmatpush2.msra.mxu0 0.0
    %2244 = vmatprep.subr.mxu0 0.0
    %2245 = vmatpush2.msra.mxu0 0.0
    %2246 = vmatprep.subr.mxu0 0.0
    %2247 = vmatpush2.msra.mxu0 0.0
    %2248 = vmatprep.mubr.f32.mxu0 0.0
    %2249 = vmatmul.mubr.f32.gmra.mxu0 %v2170
    %v2250 = vpop.f32.mrf.mxu0
    %v2251 = vadd.f32 0.0, %v2250
    %v2252 = vpop.f32.mrf.mxu0
    %v2253 = vadd.f32 0.0, %v2252
    %2254 = vdwg.mxu0
    %2255 = vmatprep.subr.mxu0 0.0
    %2256 = vmatpush1.msra.mxu0 0.0
    %2257 = vmatprep.subr.mxu0 0.0
    %2258 = vmatpush1.msra.mxu0 0.0
    %2259 = vmatprep.subr.mxu0 0.0
    %2260 = vmatpush1.msra.mxu0 0.0
    %2261 = vmatprep.subr.mxu0 0.0
    %2262 = vmatpush1.msra.mxu0 0.0
    %2263 = vmatprep.subr.mxu0 0.0
    %2264 = vmatpush1.msra.mxu0 0.0
    %2265 = vmatprep.subr.mxu0 0.0
    %2266 = vmatpush1.msra.mxu0 0.0
    %2267 = vmatprep.subr.mxu0 0.0
    %2268 = vmatpush1.msra.mxu0 0.0
    %2269 = vmatprep.subr.mxu0 0.0
    %2270 = vmatpush1.msra.mxu0 0.0
    %2271 = vmatprep.subr.mxu0 0.0
    %2272 = vmatpush1.msra.mxu0 0.0
    %2273 = vmatprep.subr.mxu0 0.0
    %2274 = vmatpush1.msra.mxu0 0.0
    %2275 = vmatprep.subr.mxu0 0.0
    %2276 = vmatpush1.msra.mxu0 0.0
    %2277 = vmatprep.subr.mxu0 0.0
    %2278 = vmatpush1.msra.mxu0 0.0
    %2279 = vmatprep.subr.mxu0 0.0
    %2280 = vmatpush1.msra.mxu0 0.0
    %2281 = vmatprep.subr.mxu0 0.0
    %2282 = vmatpush1.msra.mxu0 0.0
    %2283 = vmatprep.subr.mxu0 0.0
    %2284 = vmatpush1.msra.mxu0 0.0
    %2285 = vmatprep.subr.mxu0 %v2182
    %2286 = vmatpush1.msra.mxu0 %v2179
    %2287 = vmatprep.subr.mxu0 0.0
    %2288 = vmatpush2.msra.mxu0 0.0
    %2289 = vmatprep.subr.mxu0 0.0
    %2290 = vmatpush2.msra.mxu0 0.0
    %2291 = vmatprep.subr.mxu0 0.0
    %2292 = vmatpush2.msra.mxu0 0.0
    %2293 = vmatprep.subr.mxu0 0.0
    %2294 = vmatpush2.msra.mxu0 0.0
    %2295 = vmatprep.subr.mxu0 0.0
    %2296 = vmatpush2.msra.mxu0 0.0
    %2297 = vmatprep.subr.mxu0 0.0
    %2298 = vmatpush2.msra.mxu0 0.0
    %2299 = vmatprep.subr.mxu0 0.0
    %2300 = vmatpush2.msra.mxu0 0.0
    %2301 = vmatprep.subr.mxu0 0.0
    %2302 = vmatpush2.msra.mxu0 0.0
    %2303 = vmatprep.subr.mxu0 0.0
    %2304 = vmatpush2.msra.mxu0 0.0
    %2305 = vmatprep.subr.mxu0 0.0
    %2306 = vmatpush2.msra.mxu0 0.0
    %2307 = vmatprep.subr.mxu0 0.0
    %2308 = vmatpush2.msra.mxu0 0.0
    %2309 = vmatprep.subr.mxu0 0.0
    %2310 = vmatpush2.msra.mxu0 0.0
    %2311 = vmatprep.subr.mxu0 0.0
    %2312 = vmatpush2.msra.mxu0 0.0
    %2313 = vmatprep.subr.mxu0 0.0
    %2314 = vmatpush2.msra.mxu0 0.0
    %2315 = vmatprep.subr.mxu0 0.0
    %2316 = vmatpush2.msra.mxu0 0.0
    %2317 = vmatprep.subr.mxu0 0.0
    %2318 = vmatpush2.msra.mxu0 0.0
    %2319 = vmatprep.mubr.f32.mxu0 0.0
    %2320 = vmatmul.mubr.f32.gmra.mxu0 %v2170
    %v2321 = vpop.f32.mrf.mxu0
    %v2322 = vadd.f32 0.0, %v2321
    %v2323 = vpop.f32.mrf.mxu0
    %v2324 = vadd.f32 0.0, %v2323
    %2325 = vdwg.mxu0
    %v2326 = vadd.f32 %v2137, %v2251
    %v2327 = vadd.f32 %v2138, %v2253
    %v2328 = vadd.f32 %v2139, %v2322
    %v2329 = vadd.f32 %v2140, %v2324
    %v2330 = vld [vmem:[%s7] sm:$0xf]
    %v2331 = vld [vmem:[%s8] sm:$0xf]
    %v2332 = vsel %vm67, %v2326, 0.0
    %v2333 = vsel %vm67, %v2327, 0.0
    %v2334 = vadd.f32 %v2332, %v2333
    %v2335 = vsel %vm67, %v2328, 0.0
    %v2336 = vadd.f32 %v2334, %v2335
    %v2337 = vsel %vm67, %v2329, 0.0
    %v2338 = vadd.f32 %v2336, %v2337
    %2339 = vadd.xlane.f32.xlu0 %v2338
    %v2340 = vpop.xlane.xlu0 %2339
    %v2341 = vmul.f32 %v2340, %v484
    %v2342 = vsub.f32 %v2326, %v2341
    %v2343 = vsub.f32 %v2327, %v2341
    %v2344 = vsub.f32 %v2328, %v2341
    %v2345 = vsub.f32 %v2329, %v2341
    %v2346 = vmul.f32 %v2342, %v2342
    %v2347 = vmul.f32 %v2343, %v2343
    %v2348 = vmul.f32 %v2344, %v2344
    %v2349 = vmul.f32 %v2345, %v2345
    %v2350 = vsel %vm67, %v2346, 0.0
    %v2351 = vsel %vm67, %v2347, 0.0
    %v2352 = vadd.f32 %v2350, %v2351
    %v2353 = vsel %vm67, %v2348, 0.0
    %v2354 = vadd.f32 %v2352, %v2353
    %v2355 = vsel %vm67, %v2349, 0.0
    %v2356 = vadd.f32 %v2354, %v2355
    %2357 = vadd.xlane.f32.xlu0 %v2356
    %v2358 = vpop.xlane.xlu0 %2357
    %v2359 = vmul.f32 %v2341, 0.0
    %v2360 = vmul.f32 %v2359, %v2341
    %v2361 = vadd.f32 %v2358, %v2360
    %v2362 = vmul.f32 %v2361, %v484
    %v2363 = vadd.f32 %v2362, 1e-05
    %v2364 = vrsqrt.pop %v2363
    %v2365 = vmul.f32 %v2330, %v2364
    %v2366 = vmul.f32 %v2341, %v2365
    %v2367 = vsub.f32 %v2331, %v2366
    %2369 = vset.pattern.permute.xlu0 0
    %2370 = vperm.xlu0 %2369, %v2365
    %v2371 = vpop.permute.xlu0 %2370
    %v2373 = vmul.f32 %v2326, %v2371
    %v2374 = vmul.f32 %v2327, %v2371
    %v2375 = vmul.f32 %v2328, %v2371
    %v2376 = vmul.f32 %v2329, %v2371
    %2378 = vset.pattern.permute.xlu0 0
    %2379 = vperm.xlu0 %2378, %v2367
    %v2380 = vpop.permute.xlu0 %2379
    %v2382 = vadd.f32 %v2373, %v2380
    %v2383 = vadd.f32 %v2374, %v2380
    %v2384 = vadd.f32 %v2375, %v2380
    %v2385 = vadd.f32 %v2376, %v2380
    %v2386 = vmax.f32 %v2382, 0.0
    %v2387 = vmax.f32 %v2383, 0.0
    %v2388 = vmax.f32 %v2384, 0.0
    %v2389 = vmax.f32 %v2385, 0.0
    %v2390 = vld [vmem:[%s3] sm:$0xff]
    %v2391 = vld [vmem:[%s3 + $0x8] sm:$0xff]
    %v2393 = vsel %vm60, %v2390, 0
    %v2396 = vsel %vm60, %v2391, 0
    %v2399 = vsel %vm67, %v2386, 0
    %v2402 = vsel %vm67, %v2387, 0
    %v2405 = vsel %vm67, %v2388, 0
    %v2408 = vsel %vm67, %v2389, 0
    %2410 = vmatprep.subr.mxu0 0.0
    %2411 = vmatpush1.msra.mxu0 0.0
    %2412 = vmatprep.subr.mxu0 0.0
    %2413 = vmatpush1.msra.mxu0 0.0
    %2414 = vmatprep.subr.mxu0 0.0
    %2415 = vmatpush1.msra.mxu0 0.0
    %2416 = vmatprep.subr.mxu0 0.0
    %2417 = vmatpush1.msra.mxu0 0.0
    %2418 = vmatprep.subr.mxu0 0.0
    %2419 = vmatpush1.msra.mxu0 0.0
    %2420 = vmatprep.subr.mxu0 0.0
    %2421 = vmatpush1.msra.mxu0 0.0
    %2422 = vmatprep.subr.mxu0 0.0
    %2423 = vmatpush1.msra.mxu0 0.0
    %2424 = vmatprep.subr.mxu0 0.0
    %2425 = vmatpush1.msra.mxu0 0.0
    %2426 = vmatprep.subr.mxu0 0.0
    %2427 = vmatpush1.msra.mxu0 0.0
    %2428 = vmatprep.subr.mxu0 0.0
    %2429 = vmatpush1.msra.mxu0 0.0
    %2430 = vmatprep.subr.mxu0 0.0
    %2431 = vmatpush1.msra.mxu0 0.0
    %2432 = vmatprep.subr.mxu0 0.0
    %2433 = vmatpush1.msra.mxu0 0.0
    %2434 = vmatprep.subr.mxu0 0.0
    %2435 = vmatpush1.msra.mxu0 0.0
    %2436 = vmatprep.subr.mxu0 0.0
    %2437 = vmatpush1.msra.mxu0 0.0
    %2438 = vmatprep.subr.mxu0 0.0
    %2439 = vmatpush1.msra.mxu0 0.0
    %2440 = vmatprep.subr.mxu0 %v2402
    %2441 = vmatpush1.msra.mxu0 %v2399
    %2442 = vmatprep.subr.mxu0 0.0
    %2443 = vmatpush2.msra.mxu0 0.0
    %2444 = vmatprep.subr.mxu0 0.0
    %2445 = vmatpush2.msra.mxu0 0.0
    %2446 = vmatprep.subr.mxu0 0.0
    %2447 = vmatpush2.msra.mxu0 0.0
    %2448 = vmatprep.subr.mxu0 0.0
    %2449 = vmatpush2.msra.mxu0 0.0
    %2450 = vmatprep.subr.mxu0 0.0
    %2451 = vmatpush2.msra.mxu0 0.0
    %2452 = vmatprep.subr.mxu0 0.0
    %2453 = vmatpush2.msra.mxu0 0.0
    %2454 = vmatprep.subr.mxu0 0.0
    %2455 = vmatpush2.msra.mxu0 0.0
    %2456 = vmatprep.subr.mxu0 0.0
    %2457 = vmatpush2.msra.mxu0 0.0
    %2458 = vmatprep.subr.mxu0 0.0
    %2459 = vmatpush2.msra.mxu0 0.0
    %2460 = vmatprep.subr.mxu0 0.0
    %2461 = vmatpush2.msra.mxu0 0.0
    %2462 = vmatprep.subr.mxu0 0.0
    %2463 = vmatpush2.msra.mxu0 0.0
    %2464 = vmatprep.subr.mxu0 0.0
    %2465 = vmatpush2.msra.mxu0 0.0
    %2466 = vmatprep.subr.mxu0 0.0
    %2467 = vmatpush2.msra.mxu0 0.0
    %2468 = vmatprep.subr.mxu0 0.0
    %2469 = vmatpush2.msra.mxu0 0.0
    %2470 = vmatprep.subr.mxu0 0.0
    %2471 = vmatpush2.msra.mxu0 0.0
    %2472 = vmatprep.subr.mxu0 0.0
    %2473 = vmatpush2.msra.mxu0 0.0
    %2474 = vmatprep.mubr.f32.mxu0 0.0
    %2475 = vmatmul.mubr.f32.gmra.mxu0 %v2393
    %v2476 = vpop.f32.mrf.mxu0
    %v2477 = vadd.f32 0.0, %v2476
    %v2478 = vpop.f32.mrf.mxu0
    %v2479 = vadd.f32 0.0, %v2478
    %2480 = vmatprep.mubr.f32.mxu0 0.0
    %2481 = vmatmul.mubr.f32.gmra.mxu0 %v2396
    %v2482 = vpop.f32.mrf.mxu0
    %v2483 = vadd.f32 0.0, %v2482
    %v2484 = vpop.f32.mrf.mxu0
    %v2485 = vadd.f32 0.0, %v2484
    %2486 = vdwg.mxu0
    %2487 = vmatprep.subr.mxu0 0.0
    %2488 = vmatpush1.msra.mxu0 0.0
    %2489 = vmatprep.subr.mxu0 0.0
    %2490 = vmatpush1.msra.mxu0 0.0
    %2491 = vmatprep.subr.mxu0 0.0
    %2492 = vmatpush1.msra.mxu0 0.0
    %2493 = vmatprep.subr.mxu0 0.0
    %2494 = vmatpush1.msra.mxu0 0.0
    %2495 = vmatprep.subr.mxu0 0.0
    %2496 = vmatpush1.msra.mxu0 0.0
    %2497 = vmatprep.subr.mxu0 0.0
    %2498 = vmatpush1.msra.mxu0 0.0
    %2499 = vmatprep.subr.mxu0 0.0
    %2500 = vmatpush1.msra.mxu0 0.0
    %2501 = vmatprep.subr.mxu0 0.0
    %2502 = vmatpush1.msra.mxu0 0.0
    %2503 = vmatprep.subr.mxu0 0.0
    %2504 = vmatpush1.msra.mxu0 0.0
    %2505 = vmatprep.subr.mxu0 0.0
    %2506 = vmatpush1.msra.mxu0 0.0
    %2507 = vmatprep.subr.mxu0 0.0
    %2508 = vmatpush1.msra.mxu0 0.0
    %2509 = vmatprep.subr.mxu0 0.0
    %2510 = vmatpush1.msra.mxu0 0.0
    %2511 = vmatprep.subr.mxu0 0.0
    %2512 = vmatpush1.msra.mxu0 0.0
    %2513 = vmatprep.subr.mxu0 0.0
    %2514 = vmatpush1.msra.mxu0 0.0
    %2515 = vmatprep.subr.mxu0 0.0
    %2516 = vmatpush1.msra.mxu0 0.0
    %2517 = vmatprep.subr.mxu0 %v2408
    %2518 = vmatpush1.msra.mxu0 %v2405
    %2519 = vmatprep.subr.mxu0 0.0
    %2520 = vmatpush2.msra.mxu0 0.0
    %2521 = vmatprep.subr.mxu0 0.0
    %2522 = vmatpush2.msra.mxu0 0.0
    %2523 = vmatprep.subr.mxu0 0.0
    %2524 = vmatpush2.msra.mxu0 0.0
    %2525 = vmatprep.subr.mxu0 0.0
    %2526 = vmatpush2.msra.mxu0 0.0
    %2527 = vmatprep.subr.mxu0 0.0
    %2528 = vmatpush2.msra.mxu0 0.0
    %2529 = vmatprep.subr.mxu0 0.0
    %2530 = vmatpush2.msra.mxu0 0.0
    %2531 = vmatprep.subr.mxu0 0.0
    %2532 = vmatpush2.msra.mxu0 0.0
    %2533 = vmatprep.subr.mxu0 0.0
    %2534 = vmatpush2.msra.mxu0 0.0
    %2535 = vmatprep.subr.mxu0 0.0
    %2536 = vmatpush2.msra.mxu0 0.0
    %2537 = vmatprep.subr.mxu0 0.0
    %2538 = vmatpush2.msra.mxu0 0.0
    %2539 = vmatprep.subr.mxu0 0.0
    %2540 = vmatpush2.msra.mxu0 0.0
    %2541 = vmatprep.subr.mxu0 0.0
    %2542 = vmatpush2.msra.mxu0 0.0
    %2543 = vmatprep.subr.mxu0 0.0
    %2544 = vmatpush2.msra.mxu0 0.0
    %2545 = vmatprep.subr.mxu0 0.0
    %2546 = vmatpush2.msra.mxu0 0.0
    %2547 = vmatprep.subr.mxu0 0.0
    %2548 = vmatpush2.msra.mxu0 0.0
    %2549 = vmatprep.subr.mxu0 0.0
    %2550 = vmatpush2.msra.mxu0 0.0
    %2551 = vmatprep.mubr.f32.mxu0 0.0
    %2552 = vmatmul.mubr.f32.gmra.mxu0 %v2393
    %v2553 = vpop.f32.mrf.mxu0
    %v2554 = vadd.f32 0.0, %v2553
    %v2555 = vpop.f32.mrf.mxu0
    %v2556 = vadd.f32 0.0, %v2555
    %2557 = vmatprep.mubr.f32.mxu0 0.0
    %2558 = vmatmul.mubr.f32.gmra.mxu0 %v2396
    %v2559 = vpop.f32.mrf.mxu0
    %v2560 = vadd.f32 0.0, %v2559
    %v2561 = vpop.f32.mrf.mxu0
    %v2562 = vadd.f32 0.0, %v2561
    %2563 = vdwg.mxu0
    %v2564 = vld [vmem:[%s9] sm:$0xff]
    %v2565 = vld [vmem:[%s9 + $0x8] sm:$0xff]
    %v2566 = vld [vmem:[%s10] sm:$0xff]
    %v2567 = vld [vmem:[%s10 + $0x8] sm:$0xff]
    %v2568 = vadd.f32 %v2477, %v2479
    %v2569 = vadd.f32 %v2568, %v2554
    %v2570 = vadd.f32 %v2569, %v2556
    %2571 = vadd.xlane.f32.xlu0 %v2570
    %v2572 = vpop.xlane.xlu0 %2571
    %v2573 = vadd.f32 %v2483, %v2485
    %v2574 = vadd.f32 %v2573, %v2560
    %v2575 = vadd.f32 %v2574, %v2562
    %2576 = vadd.xlane.f32.xlu0 %v2575
    %v2577 = vpop.xlane.xlu0 %2576
    %v2578 = vmul.f32 %v2572, %v244
    %v2579 = vmul.f32 %v2577, %v244
    %v2580 = vsub.f32 %v2477, %v2578
    %v2581 = vsub.f32 %v2479, %v2578
    %v2582 = vsub.f32 %v2554, %v2578
    %v2583 = vsub.f32 %v2556, %v2578
    %v2584 = vsub.f32 %v2483, %v2579
    %v2585 = vsub.f32 %v2485, %v2579
    %v2586 = vsub.f32 %v2560, %v2579
    %v2587 = vsub.f32 %v2562, %v2579
    %v2588 = vmul.f32 %v2580, %v2580
    %v2589 = vmul.f32 %v2581, %v2581
    %v2590 = vmul.f32 %v2582, %v2582
    %v2591 = vmul.f32 %v2583, %v2583
    %v2592 = vmul.f32 %v2584, %v2584
    %v2593 = vmul.f32 %v2585, %v2585
    %v2594 = vmul.f32 %v2586, %v2586
    %v2595 = vmul.f32 %v2587, %v2587
    %v2596 = vadd.f32 %v2588, %v2589
    %v2597 = vadd.f32 %v2596, %v2590
    %v2598 = vadd.f32 %v2597, %v2591
    %2599 = vadd.xlane.f32.xlu0 %v2598
    %v2600 = vpop.xlane.xlu0 %2599
    %v2601 = vadd.f32 %v2592, %v2593
    %v2602 = vadd.f32 %v2601, %v2594
    %v2603 = vadd.f32 %v2602, %v2595
    %2604 = vadd.xlane.f32.xlu0 %v2603
    %v2605 = vpop.xlane.xlu0 %2604
    %v2606 = vmul.f32 %v2578, 136.0
    %v2607 = vmul.f32 %v2579, 136.0
    %v2608 = vmul.f32 %v2606, %v2578
    %v2609 = vmul.f32 %v2607, %v2579
    %v2610 = vadd.f32 %v2600, %v2608
    %v2611 = vadd.f32 %v2605, %v2609
    %v2612 = vmul.f32 %v2610, %v244
    %v2613 = vmul.f32 %v2611, %v244
    %v2614 = vadd.f32 %v2612, 1e-05
    %v2615 = vadd.f32 %v2613, 1e-05
    %v2616 = vrsqrt.pop %v2614
    %v2617 = vrsqrt.pop %v2615
    %v2618 = vmul.f32 %v2564, %v2616
    %v2619 = vmul.f32 %v2565, %v2617
    %v2620 = vmul.f32 %v2578, %v2618
    %v2621 = vmul.f32 %v2579, %v2619
    %v2622 = vsub.f32 %v2566, %v2620
    %v2623 = vsub.f32 %v2567, %v2621
    %2625 = vset.pattern.permute.xlu0 0
    %2626 = vperm.xlu0 %2625, %v2618
    %v2627 = vpop.permute.xlu0 %2626
    %2630 = vset.pattern.permute.xlu0 0
    %2631 = vperm.xlu0 %2630, %v2619
    %v2632 = vpop.permute.xlu0 %2631
    %v2634 = vmul.f32 %v2477, %v2627
    %v2635 = vmul.f32 %v2479, %v2627
    %v2636 = vmul.f32 %v2554, %v2627
    %v2637 = vmul.f32 %v2556, %v2627
    %v2638 = vmul.f32 %v2483, %v2632
    %v2639 = vmul.f32 %v2485, %v2632
    %v2640 = vmul.f32 %v2560, %v2632
    %v2641 = vmul.f32 %v2562, %v2632
    %2643 = vset.pattern.permute.xlu0 0
    %2644 = vperm.xlu0 %2643, %v2622
    %v2645 = vpop.permute.xlu0 %2644
    %2648 = vset.pattern.permute.xlu0 0
    %2649 = vperm.xlu0 %2648, %v2623
    %v2650 = vpop.permute.xlu0 %2649
    %v2652 = vadd.f32 %v2634, %v2645
    %v2653 = vadd.f32 %v2635, %v2645
    %v2654 = vadd.f32 %v2636, %v2645
    %v2655 = vadd.f32 %v2637, %v2645
    %v2656 = vadd.f32 %v2638, %v2650
    %v2657 = vadd.f32 %v2639, %v2650
    %v2658 = vadd.f32 %v2640, %v2650
    %v2659 = vadd.f32 %v2641, %v2650
    %v2660 = vadd.f32 %v2652, %v319
    %v2661 = vadd.f32 %v2653, %v320
    %v2662 = vadd.f32 %v2654, %v321
    %v2663 = vadd.f32 %v2655, %v322
    %v2664 = vadd.f32 %v2656, %v323
    %v2665 = vadd.f32 %v2657, %v324
    %v2666 = vadd.f32 %v2658, %v325
    %v2667 = vadd.f32 %v2659, %v326
    %v2668 = vmax.f32 %v2660, 0.0
    %v2669 = vmax.f32 %v2661, 0.0
    %v2670 = vmax.f32 %v2662, 0.0
    %v2671 = vmax.f32 %v2663, 0.0
    %v2672 = vmax.f32 %v2664, 0.0
    %v2673 = vmax.f32 %v2665, 0.0
    %v2674 = vmax.f32 %v2666, 0.0
    %v2675 = vmax.f32 %v2667, 0.0
    %2676 = vst [vmem:[#allocation2] sm:$0xff] %v2668
    %2677 = vst [vmem:[#allocation2 + $0x8] sm:$0xff] %v2669
    %2678 = vst [vmem:[#allocation2 + $0x10] sm:$0xff] %v2670
    %2679 = vst [vmem:[#allocation2 + $0x18] sm:$0xff] %v2671
    %2680 = vst [vmem:[#allocation2 + $0x20] sm:$0xff] %v2672
    %2681 = vst [vmem:[#allocation2 + $0x28] sm:$0xff] %v2673
    %2682 = vst [vmem:[#allocation2 + $0x30] sm:$0xff] %v2674
    %2683 = vst [vmem:[#allocation2 + $0x38] sm:$0xff] %v2675
    %v2684 = vadd.f32 %v2622, %v289
    %v2685 = vadd.f32 %v2623, %v290
    %v2686 = vmax.f32 %v2684, 0.0
    %v2687 = vmax.f32 %v2685, 0.0
    %2688 = vst.msk [vmem:[%s15] sm:$0xff] %vm1211, %v2686
    %2689 = vst.msk [vmem:[%s15 + $0x8] sm:$0xff] %vm1211, %v2687
    // Predicated region
    $region58: #{tpu_custom_call.1} parent=1 // pred_check
      _
    $region59: #{tpu_custom_call.1} parent=1 // pred_check_branch
      %2691 = sbr.rel (0) target = $region61
    $region60: #{tpu_custom_call.1} parent=1 // pred_region
      %s2693 = ssub.s32 1024, 1024
      %2694 = vsyncadd [#allocation3], %s2693
      %s2695 = sshll.u32 [#allocation2], 4
      %s2696 = int_to_ptr.vmem [resolvable:$true] %s2695
      %2701 = dma.vmem_to_hbm [thread:$0]  %s2696, 1024, %s14, [#allocation3], 512, 512, 32
    $region61: #{tpu_custom_call.1} parent=1 // pred_fallthru
      _
    // Predicated region
    $region62: #{tpu_custom_call.1} parent=1 // pred_check
      _
    $region63: #{tpu_custom_call.1} parent=1 // pred_check_branch
      %2703 = sbr.rel (0) target = $region65
    $region64: #{tpu_custom_call.1} parent=1 // pred_region
      _
    $region65: #{tpu_custom_call.1} parent=1 // pred_fallthru
      _
    // Predicated region
    $region66: #{tpu_custom_call.1} parent=1 // pred_check
      _
    $region67: #{tpu_custom_call.1} parent=1 // pred_check_branch
      %2705 = sbr.rel (0) target = $region69
    $region68: #{tpu_custom_call.1} parent=1 // pred_region
      %2706 = dma.done [#allocation3], 1024
    $region69: #{tpu_custom_call.1} parent=1 // pred_fallthru
      _
    // Predicated region
    $region70: #{tpu_custom_call.1} parent=1 // pred_check
      _
    $region71: #{tpu_custom_call.1} parent=1 // pred_check_branch
      %2708 = sbr.rel (0) target = $region73
    $region72: #{tpu_custom_call.1} parent=1 // pred_region
      _
    $region73: #{tpu_custom_call.1} parent=1 // pred_fallthru
      _
    %2709 = vsyncpa [#allocation3], 1

</llo_original>
